<compile_context>
chip_gen: v7x
topology: tpu7x:2x2x1
jax: 0.10.0
libtpu: 0.0.40
codegen_flags: <defaults>
</compile_context>

<pallas_src>
import functools
import math

import numpy as np
import jax
import jax.numpy as jnp
from jax.experimental import pallas as pl
from jax.experimental.pallas import tpu as pltpu


# ----------------------------------------------------------------------------
# helpers
# ----------------------------------------------------------------------------
def _round_up(x, m):
    return (x + m - 1) // m * m


def _pick_row_tile(m, max_tile=512):
    """Pick a row tile (multiple of 16, <= max_tile) that minimizes padding of m.

    Returns (tile, padded_m) with padded_m % tile == 0.
    """
    mp = _round_up(m, 16)
    if mp <= max_tile:
        return mp, mp
    for d in range(max_tile, 127, -16):
        if mp % d == 0:
            return d, mp
    return 256, _round_up(mp, 256)


# ----------------------------------------------------------------------------
# Pallas kernels
# ----------------------------------------------------------------------------
def _conv_bn_kernel(*refs, relu, has_residual):
    """One full-K matmul tile (bf16 x bf16 -> f32 on the MXU) with fused
    BN scale/shift (+ optional residual add) (+ optional ReLU) epilogue."""
    if has_residual:
        a_ref, b_ref, s_ref, t_ref, id_ref, o_ref = refs
    else:
        a_ref, b_ref, s_ref, t_ref, o_ref = refs
    acc = jnp.dot(a_ref[...], b_ref[...], preferred_element_type=jnp.float32)
    y = acc * s_ref[...] + t_ref[...]
    if has_residual:
        y = y + id_ref[...].astype(jnp.float32)
    if relu:
        y = jnp.maximum(y, 0.0)
    o_ref[...] = y.astype(o_ref.dtype)


def _maxpool_kernel(p_ref, o_ref):
    """Max over the 9 stacked 3x3 window taps."""
    m = p_ref[0]
    for i in range(1, 9):
        m = jnp.maximum(m, p_ref[i])
    o_ref[...] = m


def _avgpool_kernel(x_ref, o_ref, *, inv_area):
    """Global 7x7 average pool: mean over flattened spatial axis (f32 accumulation)."""
    o_ref[...] = jnp.sum(x_ref[...].astype(jnp.float32), axis=1) * inv_area


# ----------------------------------------------------------------------------
# Pallas wrappers
# ----------------------------------------------------------------------------
def _matmul_bn(a, b, scale, shift, *, relu, residual=None):
    """a: (M, K) bf16 patches; b: (K, N) bf16 weights; scale/shift: (1, N) f32;
    residual: optional (M, N) bf16 added before the ReLU.

    Single full-K matmul per (tm, tn) output tile: grid = (M/tm, N/tn)."""
    M, K = a.shape
    _, N = b.shape

    tm, Mp = _pick_row_tile(M)
    tn = N if N <= 256 else 256          # N is always divisible by tn for this net
    Kp = _round_up(K, 128)               # pad A and B together -> zero contributions

    if Mp != M or Kp != K:
        a = jnp.pad(a, ((0, Mp - M), (0, Kp - K)))
    if Kp != K:
        b = jnp.pad(b, ((0, Kp - K), (0, 0)))
    if residual is not None and Mp != M:
        residual = jnp.pad(residual, ((0, Mp - M), (0, 0)))

    in_specs = [
        pl.BlockSpec((tm, Kp), lambda i, j: (i, 0)),
        pl.BlockSpec((Kp, tn), lambda i, j: (0, j)),
        pl.BlockSpec((1, tn), lambda i, j: (0, j)),
        pl.BlockSpec((1, tn), lambda i, j: (0, j)),
    ]
    args = [a, b, scale, shift]
    if residual is not None:
        in_specs.append(pl.BlockSpec((tm, tn), lambda i, j: (i, j)))
        args.append(residual)

    kernel = functools.partial(_conv_bn_kernel, relu=relu,
                               has_residual=residual is not None)
    out = pl.pallas_call(
        kernel,
        out_shape=jax.ShapeDtypeStruct((Mp, N), jnp.bfloat16),
        grid_spec=pltpu.PrefetchScalarGridSpec(
            num_scalar_prefetch=0,
            grid=(Mp // tm, N // tn),
            in_specs=in_specs,
            out_specs=pl.BlockSpec((tm, tn), lambda i, j: (i, j)),
        ),
        compiler_params=pltpu.CompilerParams(
            dimension_semantics=("parallel", "parallel")),
    )(*args)
    if Mp != M:
        out = out[:M]
    return out


def _conv_impl(x, w, scale, shift, stride, relu, residual):
    """x: NHWC bf16; w: HWIO bf16; fused conv (bias-free) + BN + optional residual/ReLU."""
    N, H, W, Cin = x.shape
    kh, kw, _, Cout = w.shape
    pad = kh // 2
    Ho = (H + 2 * pad - kh) // stride + 1
    Wo = (W + 2 * pad - kw) // stride + 1

    if kh == 1 and kw == 1:
        patches = x[:, ::stride, ::stride, :].reshape(N * Ho * Wo, Cin)
    else:
        # TODO(synk): extract patches inside the kernel instead of materializing im2col.
        xp = jnp.pad(x, ((0, 0), (pad, pad), (pad, pad), (0, 0)))
        cols = []
        for i in range(kh):
            for j in range(kw):
                cols.append(xp[:, i:i + stride * (Ho - 1) + 1:stride,
                               j:j + stride * (Wo - 1) + 1:stride, :])
        patches = jnp.concatenate(cols, axis=-1).reshape(N * Ho * Wo, kh * kw * Cin)

    wm = w.reshape(kh * kw * Cin, Cout)
    res2d = None if residual is None else residual.reshape(N * Ho * Wo, Cout)
    out = _matmul_bn(patches, wm, scale, shift, relu=relu, residual=res2d)
    return out.reshape(N, Ho, Wo, Cout)


@functools.partial(jax.jit, static_argnames=("stride", "relu"))
def conv_bn_act(x, w, scale, shift, *, stride, relu):
    return _conv_impl(x, w, scale, shift, stride, relu, None)


@functools.partial(jax.jit, static_argnames=("stride",))
def conv_bn_add_relu(x, w, scale, shift, residual, *, stride=1):
    """Conv + BN + residual add + ReLU, fused into one Pallas call (bottleneck epilogue)."""
    return _conv_impl(x, w, scale, shift, stride, True, residual)


@jax.jit
def maxpool_3x3_s2(x):
    """MaxPool2d(kernel=3, stride=2, padding=1) on NHWC (bf16)."""
    N, H, W, C = x.shape
    Ho = (H + 2 - 3) // 2 + 1
    Wo = (W + 2 - 3) // 2 + 1
    neg = float("-inf")
    xp = jnp.pad(x, ((0, 0), (1, 1), (1, 1), (0, 0)), constant_values=neg)
    cols = [xp[:, i:i + 2 * (Ho - 1) + 1:2, j:j + 2 * (Wo - 1) + 1:2, :]
            for i in range(3) for j in range(3)]
    patches = jnp.stack(cols, axis=0).reshape(9, N * Ho * Wo, C)

    R = N * Ho * Wo
    tr, Rp = _pick_row_tile(R)
    if Rp != R:
        patches = jnp.pad(patches, ((0, 0), (0, Rp - R), (0, 0)), constant_values=neg)

    out = pl.pallas_call(
        _maxpool_kernel,
        out_shape=jax.ShapeDtypeStruct((Rp, C), x.dtype),
        grid_spec=pltpu.PrefetchScalarGridSpec(
            num_scalar_prefetch=0,
            grid=(Rp // tr,),
            in_specs=[pl.BlockSpec((9, tr, C), lambda i: (0, i, 0))],
            out_specs=pl.BlockSpec((tr, C), lambda i: (i, 0)),
        ),
        compiler_params=pltpu.CompilerParams(dimension_semantics=("parallel",)),
    )(patches)
    if Rp != R:
        out = out[:R]
    return out.reshape(N, Ho, Wo, C)


@jax.jit
def avgpool7_flatten(x):
    """AvgPool2d(7) on a 7x7 NHWC feature map, then flatten -> (B, C) float32."""
    N, H, W, C = x.shape
    xr = x.reshape(N, H * W, C)
    kernel = functools.partial(_avgpool_kernel, inv_area=1.0 / float(H * W))
    return pl.pallas_call(
        kernel,
        out_shape=jax.ShapeDtypeStruct((N, C), jnp.float32),
        grid_spec=pltpu.PrefetchScalarGridSpec(
            num_scalar_prefetch=0,
            grid=(1,),
            in_specs=[pl.BlockSpec((N, H * W, C), lambda i: (0, 0, 0))],
            out_specs=pl.BlockSpec((N, C), lambda i: (0, 0)),
        ),
    )(xr)


# ----------------------------------------------------------------------------
# ResNet-152 parameters (deterministic He init, BN folded to scale/shift)
# ----------------------------------------------------------------------------
def build_resnet152_params(seed=0):
    rng = np.random.default_rng(seed)

    def conv_w(k, cin, cout):
        std = math.sqrt(2.0 / (k * k * cin))
        w = rng.standard_normal((k, k, cin, cout)).astype(np.float32) * np.float32(std)
        return jnp.asarray(w, dtype=jnp.bfloat16)      # bf16 weights for the MXU

    def bn(c):
        eps = 1e-5
        gamma = (1.0 + 0.1 * rng.standard_normal(c)).astype(np.float32)
        beta = (0.1 * rng.standard_normal(c)).astype(np.float32)
        mean = (0.1 * rng.standard_normal(c)).astype(np.float32)
        var = (1.0 + 0.1 * np.abs(rng.standard_normal(c))).astype(np.float32)
        scale = (gamma / np.sqrt(var + eps)).astype(np.float32)
        shift = (beta - mean * scale).astype(np.float32)
        return jnp.asarray(scale.reshape(1, c)), jnp.asarray(shift.reshape(1, c))

    params = {"conv1": conv_w(7, 3, 64), "bn1": bn(64), "layers": []}
    inplanes = 64
    # torchvision resnet152: Bottleneck blocks [3, 8, 36, 3], expansion 4, stride on conv2
    for planes, blocks, stride in [(64, 3, 1), (128, 8, 2), (256, 36, 2), (512, 3, 2)]:
        stage = []
        for b in range(blocks):
            s = stride if b == 0 else 1
            blk = {
                "w1": conv_w(1, inplanes, planes), "bn1": bn(planes),
                "w2": conv_w(3, planes, planes), "bn2": bn(planes),
                "w3": conv_w(1, planes, planes * 4), "bn3": bn(planes * 4),
                "stride": s,
            }
            if b == 0 and (s != 1 or inplanes != planes * 4):
                blk["wd"] = conv_w(1, inplanes, planes * 4)
                blk["bnd"] = bn(planes * 4)
            stage.append(blk)
            inplanes = planes * 4
        params["layers"].append(stage)
    return params


# ----------------------------------------------------------------------------
# forward pass (mirrors Encoder.forward: cnn(images) -> AvgPool2d(7) -> flatten)
# ----------------------------------------------------------------------------
def bottleneck(x, p):
    out = conv_bn_act(x, p["w1"], *p["bn1"], stride=1, relu=True)
    out = conv_bn_act(out, p["w2"], *p["bn2"], stride=p["stride"], relu=True)
    if "wd" in p:
        identity = conv_bn_act(x, p["wd"], *p["bnd"], stride=p["stride"], relu=False)
    else:
        identity = x
    # w3 conv with fused BN + residual add + ReLU epilogue (single Pallas call).
    return conv_bn_add_relu(out, p["w3"], *p["bn3"], identity, stride=1)


def encoder_forward(images_nchw, params):
    x = jnp.transpose(images_nchw, (0, 2, 3, 1)).astype(jnp.bfloat16)   # NCHW -> NHWC bf16
    x = conv_bn_act(x, params["conv1"], *params["bn1"], stride=2, relu=True)
    x = maxpool_3x3_s2(x)
    for stage in params["layers"]:
        for blk in stage:
            x = bottleneck(x, blk)                                      # final: (B, 7, 7, 2048)
    global_features = avgpool7_flatten(x)                               # (B, 2048) float32
    return global_features


# ----------------------------------------------------------------------------
if __name__ == "__main__":
    params = build_resnet152_params(seed=0)

    key = jax.random.PRNGKey(0)
    # batch=2 kept small; 3x224x224 is required so the backbone yields a 7x7 map for AvgPool2d(7)
    images = jax.random.normal(key, (2, 3, 224, 224), dtype=jnp.float32)

    feats = encoder_forward(images, params)
    feats = jax.block_until_ready(feats)

    assert feats.shape == (2, 2048), feats.shape
    assert feats.dtype == jnp.float32
    assert bool(jnp.all(jnp.isfinite(feats)))
    print("KERNEL_OK")
</pallas_src>

<mosaic_0001>
module attributes {stable_mosaic.version = 11 : i64} {
  func.func @_conv_bn_kernel(%arg0: i32, %arg1: i32, %arg2: memref<512x256xbf16, #tpu.memory_space<vmem>>, %arg3: memref<256x64xbf16, #tpu.memory_space<vmem>>, %arg4: memref<1x64xf32, #tpu.memory_space<vmem>>, %arg5: memref<1x64xf32, #tpu.memory_space<vmem>>, %arg6: memref<512x64xbf16, #tpu.memory_space<vmem>>) attributes {dimension_semantics = [#tpu.dimension_semantics<parallel>, #tpu.dimension_semantics<parallel>], iteration_bounds = array<i64: 49, 1>, scalar_prefetch = 0 : i64, scratch_operands = 0 : i64, tpu.core_type = #tpu.core_type<tc>, window_params = [{transform_indices = @transform_0, window_bounds = array<i64: 512, 256>}, {transform_indices = @transform_1, window_bounds = array<i64: 256, 64>}, {transform_indices = @transform_2, window_bounds = array<i64: 1, 64>}, {transform_indices = @transform_3, window_bounds = array<i64: 1, 64>}, {transform_indices = @transform_4, window_bounds = array<i64: 512, 64>}]} {
    %c0 = arith.constant 0 : index
    %c0_0 = arith.constant 0 : index
    %0 = vector.load %arg2[%c0, %c0_0] : memref<512x256xbf16, #tpu.memory_space<vmem>>, vector<512x256xbf16>
    %c0_1 = arith.constant 0 : index
    %c0_2 = arith.constant 0 : index
    %1 = vector.load %arg3[%c0_1, %c0_2] : memref<256x64xbf16, #tpu.memory_space<vmem>>, vector<256x64xbf16>
    %cst = arith.constant dense<0.000000e+00> : vector<512x64xf32>
    %2 = tpu.matmul %0, %1, %cst {dimension_numbers = #tpu.dot_dimension_numbers<[1], [0], [0], [1], [0, 0, 1, 1], [], []>} : vector<512x256xbf16>, vector<256x64xbf16>, vector<512x64xf32> -> vector<512x64xf32>
    %c0_3 = arith.constant 0 : index
    %c0_4 = arith.constant 0 : index
    %3 = vector.load %arg4[%c0_3, %c0_4] : memref<1x64xf32, #tpu.memory_space<vmem>>, vector<1x64xf32>
    %4 = vector.broadcast %3 : vector<1x64xf32> to vector<512x64xf32>
    %5 = arith.mulf %2, %4 : vector<512x64xf32>
    %c0_5 = arith.constant 0 : index
    %c0_6 = arith.constant 0 : index
    %6 = vector.load %arg5[%c0_5, %c0_6] : memref<1x64xf32, #tpu.memory_space<vmem>>, vector<1x64xf32>
    %7 = vector.broadcast %6 : vector<1x64xf32> to vector<512x64xf32>
    %8 = arith.addf %5, %7 : vector<512x64xf32>
    %cst_7 = arith.constant 0.000000e+00 : f32
    %9 = vector.broadcast %cst_7 : f32 to vector<512x64xf32>
    %10 = arith.maximumf %8, %9 : vector<512x64xf32>
    %11 = arith.truncf %10 : vector<512x64xf32> to vector<512x64xbf16>
    %c0_8 = arith.constant 0 : index
    %c0_9 = arith.constant 0 : index
    %12 = vector.load %arg6[%c0_8, %c0_9] : memref<512x64xbf16, #tpu.memory_space<vmem>>, vector<512x64xbf16>
    tpu.vector_store %arg6[%c0_8, %c0_9], %11 {strides = array<i32>} : memref<512x64xbf16, #tpu.memory_space<vmem>>, vector<512x64xbf16>,
    return
  }
  func.func @transform_0(%arg0: i32, %arg1: i32) -> (i32, i32) {
    %c0_i32 = arith.constant 0 : i32
    %c0_i32_0 = arith.constant 0 : i32
    return %arg0, %c0_i32 : i32, i32
  }
  func.func @transform_1(%arg0: i32, %arg1: i32) -> (i32, i32) {
    %c0_i32 = arith.constant 0 : i32
    %c0_i32_0 = arith.constant 0 : i32
    return %c0_i32, %arg1 : i32, i32
  }
  func.func @transform_2(%arg0: i32, %arg1: i32) -> (i32, i32) {
    %c0_i32 = arith.constant 0 : i32
    %c0_i32_0 = arith.constant 0 : i32
    return %c0_i32, %arg1 : i32, i32
  }
  func.func @transform_3(%arg0: i32, %arg1: i32) -> (i32, i32) {
    %c0_i32 = arith.constant 0 : i32
    %c0_i32_0 = arith.constant 0 : i32
    return %c0_i32, %arg1 : i32, i32
  }
  func.func @transform_4(%arg0: i32, %arg1: i32) -> (i32, i32) {
    %c0_i32 = arith.constant 0 : i32
    return %arg0, %arg1 : i32, i32
  }
}

</mosaic_0001>

<llo_original>
// kernel: conv_bn_act.1
$region0: #{conv_bn_act.1}
  #allocation0 [shape = 'u32[]', space=smem, size = 0x4, offset = 0x4, fixed_abs, tag = 'smem constant byte address 0x4 - core index']
  #allocation1 [shape = 'u32[144,128]{1,0:T(1,128)}', space=vmem, size = 0x12000, scoped, tag = 'internal scratch']
  %s0 = inlined_call_operand.vmem [shape: bf16[25088,256], index: 0, kind: input, shape index: {}]
  %s1 = inlined_call_operand.vmem [shape: bf16[256,64], index: 1, kind: input, shape index: {}]
  %s2 = inlined_call_operand.vmem [shape: f32[1,64], index: 2, kind: input, shape index: {}]
  %s3 = inlined_call_operand.vmem [shape: f32[1,64], index: 3, kind: input, shape index: {}]
  %s4 = inlined_call_operand.vmem [shape: bf16[25088,64], index: 4, kind: output, shape index: {}]
  %s5 = sld [smem:[#allocation0]]
  $region49: #{conv_bn_act.1} parent=0
    _
  %s7 = ssub.s32 1, %s5
  %s8 = scalar_select 0, %s7, %s5
  loop: start=0, step=1, limit=51
  $region2: #{conv_bn_act.1} parent=0 // loop_pre_header
    _
  $region3: #{conv_bn_act.1} parent=0 // loop_header
    %s10 = sphi 0, %s14
    %p11 = scmp.ge.s32.totalorder %s10, 51
    %s17 = sphi 0, %s29
    %s18 = sphi 0, %s25
    %s19 = sphi 0, %s17
    %s20 = sphi 0, %s18
    %s21 = sphi 0, %s19
    %s22 = sphi 0, %s20
    %s32 = sphi 0, %s34
    %s35 = sphi 0, %s32
    %s36 = sphi 0, %s35
    %s52 = sphi 0, %s36
    %s58 = sphi 0, %s60
    %s61 = sphi 0, %s58
    %s62 = sphi 0, %s61
    %s78 = sphi 0, %s62
    %s84 = sphi 0, %s86
    %s87 = sphi 0, %s84
    %s88 = sphi 0, %s87
    %s104 = sphi 0, %s88
    %s110 = sphi 0, %s112
    %s113 = sphi 0, %s110
    %s114 = sphi 0, %s113
    %s130 = sphi 0, %s114
    %s138 = sphi 0, %s140
    %s141 = sphi 0, %s138
    %s142 = sphi 0, %s141
    %s158 = sphi 0, %s142
  $region4: #{conv_bn_act.1} parent=0 // loop_header_branch
    %13 = sbr.rel (%p11) target = $region8
  $region5: #{conv_bn_act.1} parent=0 // loop_body
    %s15 = ssub.s32 %s10, 1
    %s16 = ssub.s32 %s10, 2
    %s23 = sadd.s32 1, %s18
    %p24 = scmp.ge.s32.totalorder %s23, 1
    %s25 = scalar_select %p24, 0, %s23
    %s26 = sadd.s32 1, %s17
    %s27 = scalar_select %p24, %s26, %s17
    %p28 = scmp.ge.s32.totalorder %s27, 49
    %s29 = scalar_select %p28, 0, %s27
    %s30 = ssub.s32 %s17, %s29
    %p31 = scmp.eq.s32.totalorder %s30, 0
    %s33 = sadd.s32 %s32, 1
    %s34 = scalar_select %p31, %s32, %s33
    %p37 = pneg %p31
    %p38 = scmp.eq.s32.totalorder %s10, 48
    %p39 = por %p37, %p38
    %p40 = scmp.ne.s32.totalorder %s32, %s35
    %p41 = scmp.eq.s32.totalorder %s10, 0
    %p42 = por %p40, %p41
    %p43 = scmp.ne.s32.totalorder %s32, %s35
    %p44 = scmp.eq.s32.totalorder %s15, 48
    %p45 = por %p43, %p44
    %p46 = scmp.ne.s32.totalorder %s35, %s36
    %p47 = scmp.eq.s32.totalorder %s15, 0
    %p48 = por %p46, %p47
    %p49 = scmp.ne.s32.totalorder %s35, %s36
    %p50 = scmp.eq.s32.totalorder %s16, 48
    %p51 = por %p49, %p50
    %p53 = scmp.ne.s32.totalorder %s36, %s52
    %p54 = scmp.eq.s32.totalorder %s16, 0
    %p55 = por %p53, %p54
    %s56 = ssub.s32 %s18, %s25
    %p57 = scmp.eq.s32.totalorder %s56, 0
    %s59 = sadd.s32 %s58, 1
    %s60 = scalar_select %p57, %s58, %s59
    %p63 = pneg %p57
    %p64 = scmp.eq.s32.totalorder %s10, 48
    %p65 = por %p63, %p64
    %p66 = scmp.ne.s32.totalorder %s58, %s61
    %p67 = scmp.eq.s32.totalorder %s10, 0
    %p68 = por %p66, %p67
    %p69 = scmp.ne.s32.totalorder %s58, %s61
    %p70 = scmp.eq.s32.totalorder %s15, 48
    %p71 = por %p69, %p70
    %p72 = scmp.ne.s32.totalorder %s61, %s62
    %p73 = scmp.eq.s32.totalorder %s15, 0
    %p74 = por %p72, %p73
    %p75 = scmp.ne.s32.totalorder %s61, %s62
    %p76 = scmp.eq.s32.totalorder %s16, 48
    %p77 = por %p75, %p76
    %p79 = scmp.ne.s32.totalorder %s62, %s78
    %p80 = scmp.eq.s32.totalorder %s16, 0
    %p81 = por %p79, %p80
    %s82 = ssub.s32 %s18, %s25
    %p83 = scmp.eq.s32.totalorder %s82, 0
    %s85 = sadd.s32 %s84, 1
    %s86 = scalar_select %p83, %s84, %s85
    %p89 = pneg %p83
    %p90 = scmp.eq.s32.totalorder %s10, 48
    %p91 = por %p89, %p90
    %p92 = scmp.ne.s32.totalorder %s84, %s87
    %p93 = scmp.eq.s32.totalorder %s10, 0
    %p94 = por %p92, %p93
    %p95 = scmp.ne.s32.totalorder %s84, %s87
    %p96 = scmp.eq.s32.totalorder %s15, 48
    %p97 = por %p95, %p96
    %p98 = scmp.ne.s32.totalorder %s87, %s88
    %p99 = scmp.eq.s32.totalorder %s15, 0
    %p100 = por %p98, %p99
    %p101 = scmp.ne.s32.totalorder %s87, %s88
    %p102 = scmp.eq.s32.totalorder %s16, 48
    %p103 = por %p101, %p102
    %p105 = scmp.ne.s32.totalorder %s88, %s104
    %p106 = scmp.eq.s32.totalorder %s16, 0
    %p107 = por %p105, %p106
    %s108 = ssub.s32 %s18, %s25
    %p109 = scmp.eq.s32.totalorder %s108, 0
    %s111 = sadd.s32 %s110, 1
    %s112 = scalar_select %p109, %s110, %s111
    %p115 = pneg %p109
    %p116 = scmp.eq.s32.totalorder %s10, 48
    %p117 = por %p115, %p116
    %p118 = scmp.ne.s32.totalorder %s110, %s113
    %p119 = scmp.eq.s32.totalorder %s10, 0
    %p120 = por %p118, %p119
    %p121 = scmp.ne.s32.totalorder %s110, %s113
    %p122 = scmp.eq.s32.totalorder %s15, 48
    %p123 = por %p121, %p122
    %p124 = scmp.ne.s32.totalorder %s113, %s114
    %p125 = scmp.eq.s32.totalorder %s15, 0
    %p126 = por %p124, %p125
    %p127 = scmp.ne.s32.totalorder %s113, %s114
    %p128 = scmp.eq.s32.totalorder %s16, 48
    %p129 = por %p127, %p128
    %p131 = scmp.ne.s32.totalorder %s114, %s130
    %p132 = scmp.eq.s32.totalorder %s16, 0
    %p133 = por %p131, %p132
    %s134 = ssub.s32 %s17, %s29
    %s135 = ssub.s32 %s18, %s25
    %s136 = sor.u32 %s134, %s135
    %p137 = scmp.eq.s32.totalorder %s136, 0
    %s139 = sadd.s32 %s138, 1
    %s140 = scalar_select %p137, %s138, %s139
    %p143 = pneg %p137
    %p144 = scmp.eq.s32.totalorder %s10, 48
    %p145 = por %p143, %p144
    %p146 = scmp.ne.s32.totalorder %s138, %s141
    %p147 = scmp.eq.s32.totalorder %s10, 0
    %p148 = por %p146, %p147
    %p149 = scmp.ne.s32.totalorder %s138, %s141
    %p150 = scmp.eq.s32.totalorder %s15, 48
    %p151 = por %p149, %p150
    %p152 = scmp.ne.s32.totalorder %s141, %s142
    %p153 = scmp.eq.s32.totalorder %s15, 0
    %p154 = por %p152, %p153
    %p155 = scmp.ne.s32.totalorder %s141, %s142
    %p156 = scmp.eq.s32.totalorder %s16, 48
    %p157 = por %p155, %p156
    %p159 = scmp.ne.s32.totalorder %s142, %s158
    %p160 = scmp.eq.s32.totalorder %s16, 0
    %p161 = por %p159, %p160
    %p162 = scmp.le.s32.totalorder 1, %s10
    %p163 = scmp.lt.s32.totalorder %s10, 50
    %p164 = pnand %p162, %p163
    %p165 = pneg %p164
    // Predicated region
    $region9: #{conv_bn_act.1} parent=5 // pred_check
      _
    $region10: #{conv_bn_act.1} parent=5 // pred_check_branch
      %167 = sbr.rel (%p164) target = $region12
    $region11: #{conv_bn_act.1} parent=5 // pred_region
      %s168 = ssub.s32 %s10, 1
      // Predicated region
      $region13: #{conv_bn_act.1} parent=11 // pred_check
        %p169 = pneg %p74
      $region14: #{conv_bn_act.1} parent=11 // pred_check_branch
        %171 = sbr.rel (%p169) target = $region16
      $region15: #{conv_bn_act.1} parent=11 // pred_region
        %p172 = scmp.lt.s32.totalorder %s20, 0
        %s173 = scalar_select %p172, %s20, 0
        %s174 = smul.addr %s173, 4
        %s175 = scalar_lea.vmem %s1, %s174
      $region16: #{conv_bn_act.1} parent=11 // pred_fallthru
        _
      // Predicated region
      $region17: #{conv_bn_act.1} parent=11 // pred_check
        %p176 = pneg %p100
      $region18: #{conv_bn_act.1} parent=11 // pred_check_branch
        %178 = sbr.rel (%p176) target = $region20
      $region19: #{conv_bn_act.1} parent=11 // pred_region
        %p179 = scmp.lt.s32.totalorder %s20, 0
        %s180 = scalar_select %p179, %s20, 0
        %s181 = scalar_lea.vmem %s2, %s180
      $region20: #{conv_bn_act.1} parent=11 // pred_fallthru
        _
      // Predicated region
      $region21: #{conv_bn_act.1} parent=11 // pred_check
        %p182 = pneg %p126
      $region22: #{conv_bn_act.1} parent=11 // pred_check_branch
        %184 = sbr.rel (%p182) target = $region24
      $region23: #{conv_bn_act.1} parent=11 // pred_region
        %p185 = scmp.lt.s32.totalorder %s20, 0
        %s186 = scalar_select %p185, %s20, 0
        %s187 = scalar_lea.vmem %s3, %s186
      $region24: #{conv_bn_act.1} parent=11 // pred_fallthru
        _
    $region12: #{conv_bn_act.1} parent=5 // pred_fallthru
      _
    %p188 = scmp.lt.s32.totalorder %s10, 49
    // Predicated region
    $region25: #{conv_bn_act.1} parent=5 // pred_check
      %p189 = pneg %p188
    $region26: #{conv_bn_act.1} parent=5 // pred_check_branch
      %191 = sbr.rel (%p189) target = $region28
    $region27: #{conv_bn_act.1} parent=5 // pred_region
      // Predicated region
      $region29: #{conv_bn_act.1} parent=27 // pred_check
        %p192 = pneg %p42
      $region30: #{conv_bn_act.1} parent=27 // pred_check_branch
        %194 = sbr.rel (%p192) target = $region32
      $region31: #{conv_bn_act.1} parent=27 // pred_region
        %s195 = smul.u32 64, %s17
        %p196 = scmp.lt.s32.totalorder %s195, 3135
        %s197 = scalar_select %p196, %s195, 3135
        %s198 = smul.addr %s197, 2
        %s199 = smul.addr %s198, 4
        %s200 = scalar_lea.vmem %s0, %s199
        %s201 = smul.u32 64, %s17
      $region32: #{conv_bn_act.1} parent=27 // pred_fallthru
        _
    $region28: #{conv_bn_act.1} parent=5 // pred_fallthru
      _
    %p202 = scmp.le.s32.totalorder 1, %s10
    %p203 = scmp.lt.s32.totalorder %s10, 50
    %p204 = pnand %p202, %p203
    %p205 = pneg %p204
    // Predicated region
    $region33: #{conv_bn_act.1} parent=5 // pred_check
      _
    $region34: #{conv_bn_act.1} parent=5 // pred_check_branch
      %207 = sbr.rel (%p204) target = $region36
    $region35: #{conv_bn_act.1} parent=5 // pred_region
      %s208 = ssub.s32 %s10, 1
      %s209 = smul.u32 64, %s19
      %p210 = scmp.lt.s32.totalorder %s209, 3135
      %s211 = scalar_select %p210, %s209, 3135
      %s212 = smul.addr %s211, 2
      %s213 = smul.addr %s212, 4
      %s214 = scalar_lea.vmem %s0, %s213
      %p215 = pneg %p48
      %p216 = pneg %p45
      %p217 = scmp.lt.s32.totalorder %s20, 0
      %s218 = scalar_select %p217, %s20, 0
      %s219 = smul.addr %s218, 4
      %s220 = scalar_lea.vmem %s1, %s219
      %p221 = pneg %p74
      %p222 = pneg %p71
      %p223 = scmp.lt.s32.totalorder %s20, 0
      %s224 = scalar_select %p223, %s20, 0
      %s225 = scalar_lea.vmem %s2, %s224
      %p226 = pneg %p100
      %p227 = pneg %p97
      %p228 = scmp.lt.s32.totalorder %s20, 0
      %s229 = scalar_select %p228, %s20, 0
      %s230 = scalar_lea.vmem %s3, %s229
      %p231 = pneg %p126
      %p232 = pneg %p123
      %p233 = pneg %p154
      %p234 = pneg %p151
      %s235 = smul.u32 64, %s19
      %p236 = scmp.lt.s32.totalorder %s235, 3135
      %s237 = scalar_select %p236, %s235, 3135
      %p238 = scmp.lt.s32.totalorder %s20, 0
      %s239 = scalar_select %p238, %s20, 0
      %s240 = sadd.s32 %s239, %s237
      %s241 = smul.addr %s240, 4
      %s242 = scalar_lea.vmem %s4, %s241
      %s243 = smul.u32 64, %s19
      %p244 = scmp.lt.s32.totalorder %s243, 3135
      %s245 = scalar_select %p244, %s243, 3135
      %s246 = smul.addr %s245, 2
      %s247 = smul.addr %s246, 4
      %s248 = scalar_lea.vmem %s0, %s247
      %s249 = smul.u32 64, %s19
      %p250 = scmp.lt.s32.totalorder %s20, 0
      %s251 = scalar_select %p250, %s20, 0
      %s252 = smul.addr %s251, 4
      %s253 = scalar_lea.vmem %s1, %s252
      %p254 = scmp.lt.s32.totalorder %s20, 0
      %s255 = scalar_select %p254, %s20, 0
      %s256 = scalar_lea.vmem %s2, %s255
      %p257 = scmp.lt.s32.totalorder %s20, 0
      %s258 = scalar_select %p257, %s20, 0
      %s259 = scalar_lea.vmem %s3, %s258
      %s260 = smul.u32 64, %s19
      %p261 = scmp.lt.s32.totalorder %s260, 3135
      %s262 = scalar_select %p261, %s260, 3135
      %p263 = scmp.lt.s32.totalorder %s20, 0
      %s264 = scalar_select %p263, %s20, 0
      %s265 = sadd.s32 %s264, %s262
      %s266 = smul.addr %s265, 4
      %s267 = scalar_lea.vmem %s4, %s266
      %s268 = smul.u32 64, %s19
      %v270 = vld [vmem:[%s248] sm:$0xff]
      %v271 = vld [vmem:[%s248 + $0x8] sm:$0xff]
      %v272 = vld [vmem:[%s248 + $0x10] sm:$0xff]
      %v273 = vld [vmem:[%s248 + $0x18] sm:$0xff]
      %v274 = vld [vmem:[%s248 + $0x20] sm:$0xff]
      %v275 = vld [vmem:[%s248 + $0x28] sm:$0xff]
      %v276 = vld [vmem:[%s248 + $0x30] sm:$0xff]
      %v277 = vld [vmem:[%s248 + $0x38] sm:$0xff]
      %v278 = vld [vmem:[%s248 + $0x40] sm:$0xff]
      %v279 = vld [vmem:[%s248 + $0x48] sm:$0xff]
      %v280 = vld [vmem:[%s248 + $0x50] sm:$0xff]
      %v281 = vld [vmem:[%s248 + $0x58] sm:$0xff]
      %v282 = vld [vmem:[%s248 + $0x60] sm:$0xff]
      %v283 = vld [vmem:[%s248 + $0x68] sm:$0xff]
      %v284 = vld [vmem:[%s248 + $0x70] sm:$0xff]
      %v285 = vld [vmem:[%s248 + $0x78] sm:$0xff]
      %v286 = vld [vmem:[%s248 + $0x80] sm:$0xff]
      %v287 = vld [vmem:[%s248 + $0x88] sm:$0xff]
      %v288 = vld [vmem:[%s248 + $0x90] sm:$0xff]
      %v289 = vld [vmem:[%s248 + $0x98] sm:$0xff]
      %v290 = vld [vmem:[%s248 + $0xa0] sm:$0xff]
      %v291 = vld [vmem:[%s248 + $0xa8] sm:$0xff]
      %v292 = vld [vmem:[%s248 + $0xb0] sm:$0xff]
      %v293 = vld [vmem:[%s248 + $0xb8] sm:$0xff]
      %v294 = vld [vmem:[%s248 + $0xc0] sm:$0xff]
      %v295 = vld [vmem:[%s248 + $0xc8] sm:$0xff]
      %v296 = vld [vmem:[%s248 + $0xd0] sm:$0xff]
      %v297 = vld [vmem:[%s248 + $0xd8] sm:$0xff]
      %v298 = vld [vmem:[%s248 + $0xe0] sm:$0xff]
      %v299 = vld [vmem:[%s248 + $0xe8] sm:$0xff]
      %v300 = vld [vmem:[%s248 + $0xf0] sm:$0xff]
      %v301 = vld [vmem:[%s248 + $0xf8] sm:$0xff]
      %v302 = vld [vmem:[%s248 + $0x100] sm:$0xff]
      %v303 = vld [vmem:[%s248 + $0x108] sm:$0xff]
      %v304 = vld [vmem:[%s248 + $0x110] sm:$0xff]
      %v305 = vld [vmem:[%s248 + $0x118] sm:$0xff]
      %v306 = vld [vmem:[%s248 + $0x120] sm:$0xff]
      %v307 = vld [vmem:[%s248 + $0x128] sm:$0xff]
      %v308 = vld [vmem:[%s248 + $0x130] sm:$0xff]
      %v309 = vld [vmem:[%s248 + $0x138] sm:$0xff]
      %v310 = vld [vmem:[%s248 + $0x140] sm:$0xff]
      %v311 = vld [vmem:[%s248 + $0x148] sm:$0xff]
      %v312 = vld [vmem:[%s248 + $0x150] sm:$0xff]
      %v313 = vld [vmem:[%s248 + $0x158] sm:$0xff]
      %v314 = vld [vmem:[%s248 + $0x160] sm:$0xff]
      %v315 = vld [vmem:[%s248 + $0x168] sm:$0xff]
      %v316 = vld [vmem:[%s248 + $0x170] sm:$0xff]
      %v317 = vld [vmem:[%s248 + $0x178] sm:$0xff]
      %v318 = vld [vmem:[%s248 + $0x180] sm:$0xff]
      %v319 = vld [vmem:[%s248 + $0x188] sm:$0xff]
      %v320 = vld [vmem:[%s248 + $0x190] sm:$0xff]
      %v321 = vld [vmem:[%s248 + $0x198] sm:$0xff]
      %v322 = vld [vmem:[%s248 + $0x1a0] sm:$0xff]
      %v323 = vld [vmem:[%s248 + $0x1a8] sm:$0xff]
      %v324 = vld [vmem:[%s248 + $0x1b0] sm:$0xff]
      %v325 = vld [vmem:[%s248 + $0x1b8] sm:$0xff]
      %v326 = vld [vmem:[%s248 + $0x1c0] sm:$0xff]
      %v327 = vld [vmem:[%s248 + $0x1c8] sm:$0xff]
      %v328 = vld [vmem:[%s248 + $0x1d0] sm:$0xff]
      %v329 = vld [vmem:[%s248 + $0x1d8] sm:$0xff]
      %v330 = vld [vmem:[%s248 + $0x1e0] sm:$0xff]
      %v331 = vld [vmem:[%s248 + $0x1e8] sm:$0xff]
      %v332 = vld [vmem:[%s248 + $0x1f0] sm:$0xff]
      %v333 = vld [vmem:[%s248 + $0x1f8] sm:$0xff]
      %v334 = vld [vmem:[%s253] sm:$0xf]
      %v335 = vld [vmem:[%s253 + $0x4] sm:$0xf]
      %v336 = vld [vmem:[%s253 + $0x8] sm:$0xf]
      %v337 = vld [vmem:[%s253 + $0xc] sm:$0xf]
      %v338 = vld [vmem:[%s253 + $0x10] sm:$0xf]
      %v339 = vld [vmem:[%s253 + $0x14] sm:$0xf]
      %v340 = vld [vmem:[%s253 + $0x18] sm:$0xf]
      %v341 = vld [vmem:[%s253 + $0x1c] sm:$0xf]
      %v342 = vld [vmem:[%s253 + $0x20] sm:$0xf]
      %v343 = vld [vmem:[%s253 + $0x24] sm:$0xf]
      %v344 = vld [vmem:[%s253 + $0x28] sm:$0xf]
      %v345 = vld [vmem:[%s253 + $0x2c] sm:$0xf]
      %v346 = vld [vmem:[%s253 + $0x30] sm:$0xf]
      %v347 = vld [vmem:[%s253 + $0x34] sm:$0xf]
      %v348 = vld [vmem:[%s253 + $0x38] sm:$0xf]
      %v349 = vld [vmem:[%s253 + $0x3c] sm:$0xf]
      %v350 = vld [vmem:[%s253 + $0x40] sm:$0xf]
      %v351 = vld [vmem:[%s253 + $0x44] sm:$0xf]
      %v352 = vld [vmem:[%s253 + $0x48] sm:$0xf]
      %v353 = vld [vmem:[%s253 + $0x4c] sm:$0xf]
      %v354 = vld [vmem:[%s253 + $0x50] sm:$0xf]
      %v355 = vld [vmem:[%s253 + $0x54] sm:$0xf]
      %v356 = vld [vmem:[%s253 + $0x58] sm:$0xf]
      %v357 = vld [vmem:[%s253 + $0x5c] sm:$0xf]
      %v358 = vld [vmem:[%s253 + $0x60] sm:$0xf]
      %v359 = vld [vmem:[%s253 + $0x64] sm:$0xf]
      %v360 = vld [vmem:[%s253 + $0x68] sm:$0xf]
      %v361 = vld [vmem:[%s253 + $0x6c] sm:$0xf]
      %v362 = vld [vmem:[%s253 + $0x70] sm:$0xf]
      %v363 = vld [vmem:[%s253 + $0x74] sm:$0xf]
      %v364 = vld [vmem:[%s253 + $0x78] sm:$0xf]
      %v365 = vld [vmem:[%s253 + $0x7c] sm:$0xf]
      %v430 = vunpack.c.l.b16 %v270
      %v431 = vunpack.c.h.b16 %v270
      %v432 = vunpack.c.l.b16 %v271
      %v433 = vunpack.c.h.b16 %v271
      %v434 = vunpack.c.l.b16 %v272
      %v435 = vunpack.c.h.b16 %v272
      %v436 = vunpack.c.l.b16 %v273
      %v437 = vunpack.c.h.b16 %v273
      %v438 = vunpack.c.l.b16 %v274
      %v439 = vunpack.c.h.b16 %v274
      %v440 = vunpack.c.l.b16 %v275
      %v441 = vunpack.c.h.b16 %v275
      %v442 = vunpack.c.l.b16 %v276
      %v443 = vunpack.c.h.b16 %v276
      %v444 = vunpack.c.l.b16 %v277
      %v445 = vunpack.c.h.b16 %v277
      %v446 = vunpack.c.l.b16 %v278
      %v447 = vunpack.c.h.b16 %v278
      %v448 = vunpack.c.l.b16 %v279
      %v449 = vunpack.c.h.b16 %v279
      %v450 = vunpack.c.l.b16 %v280
      %v451 = vunpack.c.h.b16 %v280
      %v452 = vunpack.c.l.b16 %v281
      %v453 = vunpack.c.h.b16 %v281
      %v454 = vunpack.c.l.b16 %v282
      %v455 = vunpack.c.h.b16 %v282
      %v456 = vunpack.c.l.b16 %v283
      %v457 = vunpack.c.h.b16 %v283
      %v458 = vunpack.c.l.b16 %v284
      %v459 = vunpack.c.h.b16 %v284
      %v460 = vunpack.c.l.b16 %v285
      %v461 = vunpack.c.h.b16 %v285
      %v462 = vunpack.c.l.b16 %v286
      %v463 = vunpack.c.h.b16 %v286
      %v464 = vunpack.c.l.b16 %v287
      %v465 = vunpack.c.h.b16 %v287
      %v466 = vunpack.c.l.b16 %v288
      %v467 = vunpack.c.h.b16 %v288
      %v468 = vunpack.c.l.b16 %v289
      %v469 = vunpack.c.h.b16 %v289
      %v470 = vunpack.c.l.b16 %v290
      %v471 = vunpack.c.h.b16 %v290
      %v472 = vunpack.c.l.b16 %v291
      %v473 = vunpack.c.h.b16 %v291
      %v474 = vunpack.c.l.b16 %v292
      %v475 = vunpack.c.h.b16 %v292
      %v476 = vunpack.c.l.b16 %v293
      %v477 = vunpack.c.h.b16 %v293
      %v478 = vunpack.c.l.b16 %v294
      %v479 = vunpack.c.h.b16 %v294
      %v480 = vunpack.c.l.b16 %v295
      %v481 = vunpack.c.h.b16 %v295
      %v482 = vunpack.c.l.b16 %v296
      %v483 = vunpack.c.h.b16 %v296
      %v484 = vunpack.c.l.b16 %v297
      %v485 = vunpack.c.h.b16 %v297
      %v486 = vunpack.c.l.b16 %v298
      %v487 = vunpack.c.h.b16 %v298
      %v488 = vunpack.c.l.b16 %v299
      %v489 = vunpack.c.h.b16 %v299
      %v490 = vunpack.c.l.b16 %v300
      %v491 = vunpack.c.h.b16 %v300
      %v492 = vunpack.c.l.b16 %v301
      %v493 = vunpack.c.h.b16 %v301
      %v494 = vunpack.c.l.b16 %v302
      %v495 = vunpack.c.h.b16 %v302
      %v496 = vunpack.c.l.b16 %v303
      %v497 = vunpack.c.h.b16 %v303
      %v498 = vunpack.c.l.b16 %v304
      %v499 = vunpack.c.h.b16 %v304
      %v500 = vunpack.c.l.b16 %v305
      %v501 = vunpack.c.h.b16 %v305
      %v502 = vunpack.c.l.b16 %v306
      %v503 = vunpack.c.h.b16 %v306
      %v504 = vunpack.c.l.b16 %v307
      %v505 = vunpack.c.h.b16 %v307
      %v506 = vunpack.c.l.b16 %v308
      %v507 = vunpack.c.h.b16 %v308
      %v508 = vunpack.c.l.b16 %v309
      %v509 = vunpack.c.h.b16 %v309
      %v510 = vunpack.c.l.b16 %v310
      %v511 = vunpack.c.h.b16 %v310
      %v512 = vunpack.c.l.b16 %v311
      %v513 = vunpack.c.h.b16 %v311
      %v514 = vunpack.c.l.b16 %v312
      %v515 = vunpack.c.h.b16 %v312
      %v516 = vunpack.c.l.b16 %v313
      %v517 = vunpack.c.h.b16 %v313
      %v518 = vunpack.c.l.b16 %v314
      %v519 = vunpack.c.h.b16 %v314
      %v520 = vunpack.c.l.b16 %v315
      %v521 = vunpack.c.h.b16 %v315
      %v522 = vunpack.c.l.b16 %v316
      %v523 = vunpack.c.h.b16 %v316
      %v524 = vunpack.c.l.b16 %v317
      %v525 = vunpack.c.h.b16 %v317
      %v526 = vunpack.c.l.b16 %v318
      %v527 = vunpack.c.h.b16 %v318
      %v528 = vunpack.c.l.b16 %v319
      %v529 = vunpack.c.h.b16 %v319
      %v530 = vunpack.c.l.b16 %v320
      %v531 = vunpack.c.h.b16 %v320
      %v532 = vunpack.c.l.b16 %v321
      %v533 = vunpack.c.h.b16 %v321
      %v534 = vunpack.c.l.b16 %v322
      %v535 = vunpack.c.h.b16 %v322
      %v536 = vunpack.c.l.b16 %v323
      %v537 = vunpack.c.h.b16 %v323
      %v538 = vunpack.c.l.b16 %v324
      %v539 = vunpack.c.h.b16 %v324
      %v540 = vunpack.c.l.b16 %v325
      %v541 = vunpack.c.h.b16 %v325
      %v542 = vunpack.c.l.b16 %v326
      %v543 = vunpack.c.h.b16 %v326
      %v544 = vunpack.c.l.b16 %v327
      %v545 = vunpack.c.h.b16 %v327
      %v546 = vunpack.c.l.b16 %v328
      %v547 = vunpack.c.h.b16 %v328
      %v548 = vunpack.c.l.b16 %v329
      %v549 = vunpack.c.h.b16 %v329
      %v550 = vunpack.c.l.b16 %v330
      %v551 = vunpack.c.h.b16 %v330
      %v552 = vunpack.c.l.b16 %v331
      %v553 = vunpack.c.h.b16 %v331
      %v554 = vunpack.c.l.b16 %v332
      %v555 = vunpack.c.h.b16 %v332
      %v556 = vunpack.c.l.b16 %v333
      %v557 = vunpack.c.h.b16 %v333
      %v558 = vpack.c.b16 %v432, %v430
      %v559 = vpack.c.b16 %v433, %v431
      %v560 = vpack.c.b16 %v436, %v434
      %v561 = vpack.c.b16 %v437, %v435
      %v562 = vpack.c.b16 %v440, %v438
      %v563 = vpack.c.b16 %v441, %v439
      %v564 = vpack.c.b16 %v444, %v442
      %v565 = vpack.c.b16 %v445, %v443
      %v566 = vpack.c.b16 %v448, %v446
      %v567 = vpack.c.b16 %v449, %v447
      %v568 = vpack.c.b16 %v452, %v450
      %v569 = vpack.c.b16 %v453, %v451
      %v570 = vpack.c.b16 %v456, %v454
      %v571 = vpack.c.b16 %v457, %v455
      %v572 = vpack.c.b16 %v460, %v458
      %v573 = vpack.c.b16 %v461, %v459
      %v574 = vpack.c.b16 %v464, %v462
      %v575 = vpack.c.b16 %v465, %v463
      %v576 = vpack.c.b16 %v468, %v466
      %v577 = vpack.c.b16 %v469, %v467
      %v578 = vpack.c.b16 %v472, %v470
      %v579 = vpack.c.b16 %v473, %v471
      %v580 = vpack.c.b16 %v476, %v474
      %v581 = vpack.c.b16 %v477, %v475
      %v582 = vpack.c.b16 %v480, %v478
      %v583 = vpack.c.b16 %v481, %v479
      %v584 = vpack.c.b16 %v484, %v482
      %v585 = vpack.c.b16 %v485, %v483
      %v586 = vpack.c.b16 %v488, %v486
      %v587 = vpack.c.b16 %v489, %v487
      %v588 = vpack.c.b16 %v492, %v490
      %v589 = vpack.c.b16 %v493, %v491
      %v590 = vpack.c.b16 %v496, %v494
      %v591 = vpack.c.b16 %v497, %v495
      %v592 = vpack.c.b16 %v500, %v498
      %v593 = vpack.c.b16 %v501, %v499
      %v594 = vpack.c.b16 %v504, %v502
      %v595 = vpack.c.b16 %v505, %v503
      %v596 = vpack.c.b16 %v508, %v506
      %v597 = vpack.c.b16 %v509, %v507
      %v598 = vpack.c.b16 %v512, %v510
      %v599 = vpack.c.b16 %v513, %v511
      %v600 = vpack.c.b16 %v516, %v514
      %v601 = vpack.c.b16 %v517, %v515
      %v602 = vpack.c.b16 %v520, %v518
      %v603 = vpack.c.b16 %v521, %v519
      %v604 = vpack.c.b16 %v524, %v522
      %v605 = vpack.c.b16 %v525, %v523
      %v606 = vpack.c.b16 %v528, %v526
      %v607 = vpack.c.b16 %v529, %v527
      %v608 = vpack.c.b16 %v532, %v530
      %v609 = vpack.c.b16 %v533, %v531
      %v610 = vpack.c.b16 %v536, %v534
      %v611 = vpack.c.b16 %v537, %v535
      %v612 = vpack.c.b16 %v540, %v538
      %v613 = vpack.c.b16 %v541, %v539
      %v614 = vpack.c.b16 %v544, %v542
      %v615 = vpack.c.b16 %v545, %v543
      %v616 = vpack.c.b16 %v548, %v546
      %v617 = vpack.c.b16 %v549, %v547
      %v618 = vpack.c.b16 %v552, %v550
      %v619 = vpack.c.b16 %v553, %v551
      %v620 = vpack.c.b16 %v556, %v554
      %v621 = vpack.c.b16 %v557, %v555
      %v718 = vunpack.c.l.b16 %v334
      %v719 = vunpack.c.l.b16 %v335
      %v720 = vunpack.c.l.b16 %v336
      %v721 = vunpack.c.l.b16 %v337
      %v722 = vunpack.c.l.b16 %v338
      %v723 = vunpack.c.l.b16 %v339
      %v724 = vunpack.c.l.b16 %v340
      %v725 = vunpack.c.l.b16 %v341
      %v726 = vunpack.c.l.b16 %v342
      %v727 = vunpack.c.l.b16 %v343
      %v728 = vunpack.c.l.b16 %v344
      %v729 = vunpack.c.l.b16 %v345
      %v730 = vunpack.c.l.b16 %v346
      %v731 = vunpack.c.l.b16 %v347
      %v732 = vunpack.c.l.b16 %v348
      %v733 = vunpack.c.l.b16 %v349
      %v734 = vunpack.c.l.b16 %v350
      %v735 = vunpack.c.l.b16 %v351
      %v736 = vunpack.c.l.b16 %v352
      %v737 = vunpack.c.l.b16 %v353
      %v738 = vunpack.c.l.b16 %v354
      %v739 = vunpack.c.l.b16 %v355
      %v740 = vunpack.c.l.b16 %v356
      %v741 = vunpack.c.l.b16 %v357
      %v742 = vunpack.c.l.b16 %v358
      %v743 = vunpack.c.l.b16 %v359
      %v744 = vunpack.c.l.b16 %v360
      %v745 = vunpack.c.l.b16 %v361
      %v746 = vunpack.c.l.b16 %v362
      %v747 = vunpack.c.l.b16 %v363
      %v748 = vunpack.c.l.b16 %v364
      %v749 = vunpack.c.l.b16 %v365
      %v750 = vpack.c.b16 %v719, %v718
      %v751 = vpack.c.b16 %v721, %v720
      %v752 = vpack.c.b16 %v723, %v722
      %v753 = vpack.c.b16 %v725, %v724
      %v754 = vpack.c.b16 %v727, %v726
      %v755 = vpack.c.b16 %v729, %v728
      %v756 = vpack.c.b16 %v731, %v730
      %v757 = vpack.c.b16 %v733, %v732
      %v758 = vpack.c.b16 %v735, %v734
      %v759 = vpack.c.b16 %v737, %v736
      %v760 = vpack.c.b16 %v739, %v738
      %v761 = vpack.c.b16 %v741, %v740
      %v762 = vpack.c.b16 %v743, %v742
      %v763 = vpack.c.b16 %v745, %v744
      %v764 = vpack.c.b16 %v747, %v746
      %v765 = vpack.c.b16 %v749, %v748
      %782 = vmatprep.subr.bf16.mxu0 0
      %783 = vmatpush1.bf16.msra.mxu0 %v750
      %784 = vmatprep.subr.bf16.mxu0 0
      %785 = vmatpush1.bf16.msra.mxu0 %v751
      %786 = vmatprep.subr.bf16.mxu0 0
      %787 = vmatpush1.bf16.msra.mxu0 %v752
      %788 = vmatprep.subr.bf16.mxu0 0
      %789 = vmatpush1.bf16.msra.mxu0 %v753
      %790 = vmatprep.subr.bf16.mxu0 0
      %791 = vmatpush1.bf16.msra.mxu0 %v754
      %792 = vmatprep.subr.bf16.mxu0 0
      %793 = vmatpush1.bf16.msra.mxu0 %v755
      %794 = vmatprep.subr.bf16.mxu0 0
      %795 = vmatpush1.bf16.msra.mxu0 %v756
      %796 = vmatprep.subr.bf16.mxu0 0
      %797 = vmatpush1.bf16.msra.mxu0 %v757
      %798 = vmatprep.subr.bf16.mxu0 0
      %799 = vmatpush1.bf16.msra.mxu0 %v758
      %800 = vmatprep.subr.bf16.mxu0 0
      %801 = vmatpush1.bf16.msra.mxu0 %v759
      %802 = vmatprep.subr.bf16.mxu0 0
      %803 = vmatpush1.bf16.msra.mxu0 %v760
      %804 = vmatprep.subr.bf16.mxu0 0
      %805 = vmatpush1.bf16.msra.mxu0 %v761
      %806 = vmatprep.subr.bf16.mxu0 0
      %807 = vmatpush1.bf16.msra.mxu0 %v762
      %808 = vmatprep.subr.bf16.mxu0 0
      %809 = vmatpush1.bf16.msra.mxu0 %v763
      %810 = vmatprep.subr.bf16.mxu0 0
      %811 = vmatpush1.bf16.msra.mxu0 %v764
      %812 = vmatprep.subr.bf16.mxu0 0
      %813 = vmatpush1.bf16.msra.mxu0 %v765
      %814 = vmatprep.mubr.bf16.mxu0 %v559
      %815 = vmatmul.mubr.bf16.gmra.mrb[0].mxu0 %v558
      %v816 = vpop.f32.mrb[0].mxu0
      %v817 = vadd.f32 0.0, %v816
      %v818 = vpop.f32.mrb[0].mxu0
      %v819 = vpop.f32.mrb[0].mxu0
      %v820 = vadd.f32 0.0, %v819
      %v821 = vpop.f32.mrb[0].mxu0
      %822 = vmatprep.mubr.bf16.mxu0 %v561
      %823 = vmatmul.mubr.bf16.gmra.mrb[0].mxu0 %v560
      %v824 = vpop.f32.mrb[0].mxu0
      %v825 = vadd.f32 0.0, %v824
      %v826 = vpop.f32.mrb[0].mxu0
      %v827 = vpop.f32.mrb[0].mxu0
      %v828 = vadd.f32 0.0, %v827
      %v829 = vpop.f32.mrb[0].mxu0
      %830 = vmatprep.mubr.bf16.mxu0 %v563
      %831 = vmatmul.mubr.bf16.gmra.mrb[0].mxu0 %v562
      %v832 = vpop.f32.mrb[0].mxu0
      %v833 = vadd.f32 0.0, %v832
      %v834 = vpop.f32.mrb[0].mxu0
      %v835 = vpop.f32.mrb[0].mxu0
      %v836 = vadd.f32 0.0, %v835
      %v837 = vpop.f32.mrb[0].mxu0
      %838 = vmatprep.mubr.bf16.mxu0 %v565
      %839 = vmatmul.mubr.bf16.gmra.mrb[0].mxu0 %v564
      %v840 = vpop.f32.mrb[0].mxu0
      %v841 = vadd.f32 0.0, %v840
      %v842 = vpop.f32.mrb[0].mxu0
      %v843 = vpop.f32.mrb[0].mxu0
      %v844 = vadd.f32 0.0, %v843
      %v845 = vpop.f32.mrb[0].mxu0
      %846 = vmatprep.mubr.bf16.mxu0 %v567
      %847 = vmatmul.mubr.bf16.gmra.mrb[0].mxu0 %v566
      %v848 = vpop.f32.mrb[0].mxu0
      %v849 = vadd.f32 0.0, %v848
      %v850 = vpop.f32.mrb[0].mxu0
      %v851 = vpop.f32.mrb[0].mxu0
      %v852 = vadd.f32 0.0, %v851
      %v853 = vpop.f32.mrb[0].mxu0
      %854 = vmatprep.mubr.bf16.mxu0 %v569
      %855 = vmatmul.mubr.bf16.gmra.mrb[0].mxu0 %v568
      %v856 = vpop.f32.mrb[0].mxu0
      %v857 = vadd.f32 0.0, %v856
      %v858 = vpop.f32.mrb[0].mxu0
      %v859 = vpop.f32.mrb[0].mxu0
      %v860 = vadd.f32 0.0, %v859
      %v861 = vpop.f32.mrb[0].mxu0
      %862 = vmatprep.mubr.bf16.mxu0 %v571
      %863 = vmatmul.mubr.bf16.gmra.mrb[0].mxu0 %v570
      %v864 = vpop.f32.mrb[0].mxu0
      %v865 = vadd.f32 0.0, %v864
      %v866 = vpop.f32.mrb[0].mxu0
      %v867 = vpop.f32.mrb[0].mxu0
      %v868 = vadd.f32 0.0, %v867
      %v869 = vpop.f32.mrb[0].mxu0
      %870 = vmatprep.mubr.bf16.mxu0 %v573
      %871 = vmatmul.mubr.bf16.gmra.mrb[0].mxu0 %v572
      %v872 = vpop.f32.mrb[0].mxu0
      %v873 = vadd.f32 0.0, %v872
      %v874 = vpop.f32.mrb[0].mxu0
      %v875 = vpop.f32.mrb[0].mxu0
      %v876 = vadd.f32 0.0, %v875
      %v877 = vpop.f32.mrb[0].mxu0
      %878 = vmatprep.mubr.bf16.mxu0 %v575
      %879 = vmatmul.mubr.bf16.gmra.mrb[0].mxu0 %v574
      %v880 = vpop.f32.mrb[0].mxu0
      %v881 = vadd.f32 0.0, %v880
      %v882 = vpop.f32.mrb[0].mxu0
      %v883 = vpop.f32.mrb[0].mxu0
      %v884 = vadd.f32 0.0, %v883
      %v885 = vpop.f32.mrb[0].mxu0
      %886 = vmatprep.mubr.bf16.mxu0 %v577
      %887 = vmatmul.mubr.bf16.gmra.mrb[0].mxu0 %v576
      %v888 = vpop.f32.mrb[0].mxu0
      %v889 = vadd.f32 0.0, %v888
      %v890 = vpop.f32.mrb[0].mxu0
      %v891 = vpop.f32.mrb[0].mxu0
      %v892 = vadd.f32 0.0, %v891
      %v893 = vpop.f32.mrb[0].mxu0
      %894 = vmatprep.mubr.bf16.mxu0 %v579
      %895 = vmatmul.mubr.bf16.gmra.mrb[0].mxu0 %v578
      %v896 = vpop.f32.mrb[0].mxu0
      %v897 = vadd.f32 0.0, %v896
      %v898 = vpop.f32.mrb[0].mxu0
      %v899 = vpop.f32.mrb[0].mxu0
      %v900 = vadd.f32 0.0, %v899
      %v901 = vpop.f32.mrb[0].mxu0
      %902 = vmatprep.mubr.bf16.mxu0 %v581
      %903 = vmatmul.mubr.bf16.gmra.mrb[0].mxu0 %v580
      %v904 = vpop.f32.mrb[0].mxu0
      %v905 = vadd.f32 0.0, %v904
      %v906 = vpop.f32.mrb[0].mxu0
      %v907 = vpop.f32.mrb[0].mxu0
      %v908 = vadd.f32 0.0, %v907
      %v909 = vpop.f32.mrb[0].mxu0
      %910 = vmatprep.mubr.bf16.mxu0 %v583
      %911 = vmatmul.mubr.bf16.gmra.mrb[0].mxu0 %v582
      %v912 = vpop.f32.mrb[0].mxu0
      %v913 = vadd.f32 0.0, %v912
      %v914 = vpop.f32.mrb[0].mxu0
      %v915 = vpop.f32.mrb[0].mxu0
      %v916 = vadd.f32 0.0, %v915
      %v917 = vpop.f32.mrb[0].mxu0
      %918 = vmatprep.mubr.bf16.mxu0 %v585
      %919 = vmatmul.mubr.bf16.gmra.mrb[0].mxu0 %v584
      %v920 = vpop.f32.mrb[0].mxu0
      %v921 = vadd.f32 0.0, %v920
      %v922 = vpop.f32.mrb[0].mxu0
      %v923 = vpop.f32.mrb[0].mxu0
      %v924 = vadd.f32 0.0, %v923
      %v925 = vpop.f32.mrb[0].mxu0
      %926 = vmatprep.mubr.bf16.mxu0 %v587
      %927 = vmatmul.mubr.bf16.gmra.mrb[0].mxu0 %v586
      %v928 = vpop.f32.mrb[0].mxu0
      %v929 = vadd.f32 0.0, %v928
      %v930 = vpop.f32.mrb[0].mxu0
      %v931 = vpop.f32.mrb[0].mxu0
      %v932 = vadd.f32 0.0, %v931
      %v933 = vpop.f32.mrb[0].mxu0
      %934 = vmatprep.mubr.bf16.mxu0 %v589
      %935 = vmatmul.mubr.bf16.gmra.mrb[0].mxu0 %v588
      %v936 = vpop.f32.mrb[0].mxu0
      %v937 = vadd.f32 0.0, %v936
      %v938 = vpop.f32.mrb[0].mxu0
      %v939 = vpop.f32.mrb[0].mxu0
      %v940 = vadd.f32 0.0, %v939
      %v941 = vpop.f32.mrb[0].mxu0
      %942 = vmatprep.mubr.bf16.mxu0 %v591
      %943 = vmatmul.mubr.bf16.gmra.mrb[0].mxu0 %v590
      %v944 = vpop.f32.mrb[0].mxu0
      %v945 = vadd.f32 0.0, %v944
      %v946 = vpop.f32.mrb[0].mxu0
      %v947 = vpop.f32.mrb[0].mxu0
      %v948 = vadd.f32 0.0, %v947
      %v949 = vpop.f32.mrb[0].mxu0
      %950 = vmatprep.mubr.bf16.mxu0 %v593
      %951 = vmatmul.mubr.bf16.gmra.mrb[0].mxu0 %v592
      %v952 = vpop.f32.mrb[0].mxu0
      %v953 = vadd.f32 0.0, %v952
      %v954 = vpop.f32.mrb[0].mxu0
      %v955 = vpop.f32.mrb[0].mxu0
      %v956 = vadd.f32 0.0, %v955
      %v957 = vpop.f32.mrb[0].mxu0
      %958 = vmatprep.mubr.bf16.mxu0 %v595
      %959 = vmatmul.mubr.bf16.gmra.mrb[0].mxu0 %v594
      %v960 = vpop.f32.mrb[0].mxu0
      %v961 = vadd.f32 0.0, %v960
      %v962 = vpop.f32.mrb[0].mxu0
      %v963 = vpop.f32.mrb[0].mxu0
      %v964 = vadd.f32 0.0, %v963
      %v965 = vpop.f32.mrb[0].mxu0
      %966 = vmatprep.mubr.bf16.mxu0 %v597
      %967 = vmatmul.mubr.bf16.gmra.mrb[0].mxu0 %v596
      %v968 = vpop.f32.mrb[0].mxu0
      %v969 = vadd.f32 0.0, %v968
      %v970 = vpop.f32.mrb[0].mxu0
      %v971 = vpop.f32.mrb[0].mxu0
      %v972 = vadd.f32 0.0, %v971
      %v973 = vpop.f32.mrb[0].mxu0
      %974 = vmatprep.mubr.bf16.mxu0 %v599
      %975 = vmatmul.mubr.bf16.gmra.mrb[0].mxu0 %v598
      %v976 = vpop.f32.mrb[0].mxu0
      %v977 = vadd.f32 0.0, %v976
      %v978 = vpop.f32.mrb[0].mxu0
      %v979 = vpop.f32.mrb[0].mxu0
      %v980 = vadd.f32 0.0, %v979
      %v981 = vpop.f32.mrb[0].mxu0
      %982 = vmatprep.mubr.bf16.mxu0 %v601
      %983 = vmatmul.mubr.bf16.gmra.mrb[0].mxu0 %v600
      %v984 = vpop.f32.mrb[0].mxu0
      %v985 = vadd.f32 0.0, %v984
      %v986 = vpop.f32.mrb[0].mxu0
      %v987 = vpop.f32.mrb[0].mxu0
      %v988 = vadd.f32 0.0, %v987
      %v989 = vpop.f32.mrb[0].mxu0
      %990 = vmatprep.mubr.bf16.mxu0 %v603
      %991 = vmatmul.mubr.bf16.gmra.mrb[0].mxu0 %v602
      %v992 = vpop.f32.mrb[0].mxu0
      %v993 = vadd.f32 0.0, %v992
      %v994 = vpop.f32.mrb[0].mxu0
      %v995 = vpop.f32.mrb[0].mxu0
      %v996 = vadd.f32 0.0, %v995
      %v997 = vpop.f32.mrb[0].mxu0
      %998 = vmatprep.mubr.bf16.mxu0 %v605
      %999 = vmatmul.mubr.bf16.gmra.mrb[0].mxu0 %v604
      %v1000 = vpop.f32.mrb[0].mxu0
      %v1001 = vadd.f32 0.0, %v1000
      %v1002 = vpop.f32.mrb[0].mxu0
      %v1003 = vpop.f32.mrb[0].mxu0
      %v1004 = vadd.f32 0.0, %v1003
      %v1005 = vpop.f32.mrb[0].mxu0
      %1006 = vmatprep.mubr.bf16.mxu0 %v607
      %1007 = vmatmul.mubr.bf16.gmra.mrb[0].mxu0 %v606
      %v1008 = vpop.f32.mrb[0].mxu0
      %v1009 = vadd.f32 0.0, %v1008
      %v1010 = vpop.f32.mrb[0].mxu0
      %v1011 = vpop.f32.mrb[0].mxu0
      %v1012 = vadd.f32 0.0, %v1011
      %v1013 = vpop.f32.mrb[0].mxu0
      %1014 = vmatprep.mubr.bf16.mxu0 %v609
      %1015 = vmatmul.mubr.bf16.gmra.mrb[0].mxu0 %v608
      %v1016 = vpop.f32.mrb[0].mxu0
      %v1017 = vadd.f32 0.0, %v1016
      %v1018 = vpop.f32.mrb[0].mxu0
      %v1019 = vpop.f32.mrb[0].mxu0
      %v1020 = vadd.f32 0.0, %v1019
      %v1021 = vpop.f32.mrb[0].mxu0
      %1022 = vmatprep.mubr.bf16.mxu0 %v611
      %1023 = vmatmul.mubr.bf16.gmra.mrb[0].mxu0 %v610
      %v1024 = vpop.f32.mrb[0].mxu0
      %v1025 = vadd.f32 0.0, %v1024
      %v1026 = vpop.f32.mrb[0].mxu0
      %v1027 = vpop.f32.mrb[0].mxu0
      %v1028 = vadd.f32 0.0, %v1027
      %v1029 = vpop.f32.mrb[0].mxu0
      %1030 = vmatprep.mubr.bf16.mxu0 %v613
      %1031 = vmatmul.mubr.bf16.gmra.mrb[0].mxu0 %v612
      %v1032 = vpop.f32.mrb[0].mxu0
      %v1033 = vadd.f32 0.0, %v1032
      %v1034 = vpop.f32.mrb[0].mxu0
      %v1035 = vpop.f32.mrb[0].mxu0
      %v1036 = vadd.f32 0.0, %v1035
      %v1037 = vpop.f32.mrb[0].mxu0
      %1038 = vmatprep.mubr.bf16.mxu0 %v615
      %1039 = vmatmul.mubr.bf16.gmra.mrb[0].mxu0 %v614
      %v1040 = vpop.f32.mrb[0].mxu0
      %v1041 = vadd.f32 0.0, %v1040
      %v1042 = vpop.f32.mrb[0].mxu0
      %v1043 = vpop.f32.mrb[0].mxu0
      %v1044 = vadd.f32 0.0, %v1043
      %v1045 = vpop.f32.mrb[0].mxu0
      %1046 = vmatprep.mubr.bf16.mxu0 %v617
      %1047 = vmatmul.mubr.bf16.gmra.mrb[0].mxu0 %v616
      %v1048 = vpop.f32.mrb[0].mxu0
      %v1049 = vadd.f32 0.0, %v1048
      %v1050 = vpop.f32.mrb[0].mxu0
      %v1051 = vpop.f32.mrb[0].mxu0
      %v1052 = vadd.f32 0.0, %v1051
      %v1053 = vpop.f32.mrb[0].mxu0
      %1054 = vmatprep.mubr.bf16.mxu0 %v619
      %1055 = vmatmul.mubr.bf16.gmra.mrb[0].mxu0 %v618
      %v1056 = vpop.f32.mrb[0].mxu0
      %v1057 = vadd.f32 0.0, %v1056
      %v1058 = vpop.f32.mrb[0].mxu0
      %v1059 = vpop.f32.mrb[0].mxu0
      %v1060 = vadd.f32 0.0, %v1059
      %v1061 = vpop.f32.mrb[0].mxu0
      %1062 = vmatprep.mubr.bf16.mxu0 %v621
      %1063 = vmatmul.mubr.bf16.gmra.mrb[0].mxu0 %v620
      %v1064 = vpop.f32.mrb[0].mxu0
      %v1065 = vadd.f32 0.0, %v1064
      %v1066 = vpop.f32.mrb[0].mxu0
      %v1067 = vpop.f32.mrb[0].mxu0
      %v1068 = vadd.f32 0.0, %v1067
      %v1069 = vpop.f32.mrb[0].mxu0
      %1070 = vdwg.mxu0
      %v1071 = vld [vmem:[%s256] sm:$0x1]
      %v1073 = vlaneseq
      %v1074 = vshrl.u32 %v1073, 7
      %v1075 = vsub.s32 0, %v1074
      %v1076 = vrot.slane %v1071, %v1075
      %v1078 = vmul.f32 %v817, %v1076
      %v1079 = vmul.f32 %v820, %v1076
      %v1080 = vmul.f32 %v825, %v1076
      %v1081 = vmul.f32 %v828, %v1076
      %v1082 = vmul.f32 %v833, %v1076
      %v1083 = vmul.f32 %v836, %v1076
      %v1084 = vmul.f32 %v841, %v1076
      %v1085 = vmul.f32 %v844, %v1076
      %v1086 = vmul.f32 %v849, %v1076
      %v1087 = vmul.f32 %v852, %v1076
      %v1088 = vmul.f32 %v857, %v1076
      %v1089 = vmul.f32 %v860, %v1076
      %v1090 = vmul.f32 %v865, %v1076
      %v1091 = vmul.f32 %v868, %v1076
      %v1092 = vmul.f32 %v873, %v1076
      %v1093 = vmul.f32 %v876, %v1076
      %v1094 = vmul.f32 %v881, %v1076
      %v1095 = vmul.f32 %v884, %v1076
      %v1096 = vmul.f32 %v889, %v1076
      %v1097 = vmul.f32 %v892, %v1076
      %v1098 = vmul.f32 %v897, %v1076
      %v1099 = vmul.f32 %v900, %v1076
      %v1100 = vmul.f32 %v905, %v1076
      %v1101 = vmul.f32 %v908, %v1076
      %v1102 = vmul.f32 %v913, %v1076
      %v1103 = vmul.f32 %v916, %v1076
      %v1104 = vmul.f32 %v921, %v1076
      %v1105 = vmul.f32 %v924, %v1076
      %v1106 = vmul.f32 %v929, %v1076
      %v1107 = vmul.f32 %v932, %v1076
      %v1108 = vmul.f32 %v937, %v1076
      %v1109 = vmul.f32 %v940, %v1076
      %v1110 = vmul.f32 %v945, %v1076
      %v1111 = vmul.f32 %v948, %v1076
      %v1112 = vmul.f32 %v953, %v1076
      %v1113 = vmul.f32 %v956, %v1076
      %v1114 = vmul.f32 %v961, %v1076
      %v1115 = vmul.f32 %v964, %v1076
      %v1116 = vmul.f32 %v969, %v1076
      %v1117 = vmul.f32 %v972, %v1076
      %v1118 = vmul.f32 %v977, %v1076
      %v1119 = vmul.f32 %v980, %v1076
      %v1120 = vmul.f32 %v985, %v1076
      %v1121 = vmul.f32 %v988, %v1076
      %v1122 = vmul.f32 %v993, %v1076
      %v1123 = vmul.f32 %v996, %v1076
      %v1124 = vmul.f32 %v1001, %v1076
      %v1125 = vmul.f32 %v1004, %v1076
      %v1126 = vmul.f32 %v1009, %v1076
      %v1127 = vmul.f32 %v1012, %v1076
      %v1128 = vmul.f32 %v1017, %v1076
      %v1129 = vmul.f32 %v1020, %v1076
      %v1130 = vmul.f32 %v1025, %v1076
      %v1131 = vmul.f32 %v1028, %v1076
      %v1132 = vmul.f32 %v1033, %v1076
      %v1133 = vmul.f32 %v1036, %v1076
      %v1134 = vmul.f32 %v1041, %v1076
      %v1135 = vmul.f32 %v1044, %v1076
      %v1136 = vmul.f32 %v1049, %v1076
      %v1137 = vmul.f32 %v1052, %v1076
      %v1138 = vmul.f32 %v1057, %v1076
      %v1139 = vmul.f32 %v1060, %v1076
      %v1140 = vmul.f32 %v1065, %v1076
      %v1141 = vmul.f32 %v1068, %v1076
      %v1142 = vld [vmem:[%s259] sm:$0x1]
      %v1144 = vlaneseq
      %v1145 = vshrl.u32 %v1144, 7
      %v1146 = vsub.s32 0, %v1145
      %v1147 = vrot.slane %v1142, %v1146
      %v1149 = vadd.f32 %v1078, %v1147
      %v1150 = vadd.f32 %v1079, %v1147
      %v1151 = vadd.f32 %v1080, %v1147
      %v1152 = vadd.f32 %v1081, %v1147
      %v1153 = vadd.f32 %v1082, %v1147
      %v1154 = vadd.f32 %v1083, %v1147
      %v1155 = vadd.f32 %v1084, %v1147
      %v1156 = vadd.f32 %v1085, %v1147
      %v1157 = vadd.f32 %v1086, %v1147
      %v1158 = vadd.f32 %v1087, %v1147
      %v1159 = vadd.f32 %v1088, %v1147
      %v1160 = vadd.f32 %v1089, %v1147
      %v1161 = vadd.f32 %v1090, %v1147
      %v1162 = vadd.f32 %v1091, %v1147
      %v1163 = vadd.f32 %v1092, %v1147
      %v1164 = vadd.f32 %v1093, %v1147
      %v1165 = vadd.f32 %v1094, %v1147
      %v1166 = vadd.f32 %v1095, %v1147
      %v1167 = vadd.f32 %v1096, %v1147
      %v1168 = vadd.f32 %v1097, %v1147
      %v1169 = vadd.f32 %v1098, %v1147
      %v1170 = vadd.f32 %v1099, %v1147
      %v1171 = vadd.f32 %v1100, %v1147
      %v1172 = vadd.f32 %v1101, %v1147
      %v1173 = vadd.f32 %v1102, %v1147
      %v1174 = vadd.f32 %v1103, %v1147
      %v1175 = vadd.f32 %v1104, %v1147
      %v1176 = vadd.f32 %v1105, %v1147
      %v1177 = vadd.f32 %v1106, %v1147
      %v1178 = vadd.f32 %v1107, %v1147
      %v1179 = vadd.f32 %v1108, %v1147
      %v1180 = vadd.f32 %v1109, %v1147
      %v1181 = vadd.f32 %v1110, %v1147
      %v1182 = vadd.f32 %v1111, %v1147
      %v1183 = vadd.f32 %v1112, %v1147
      %v1184 = vadd.f32 %v1113, %v1147
      %v1185 = vadd.f32 %v1114, %v1147
      %v1186 = vadd.f32 %v1115, %v1147
      %v1187 = vadd.f32 %v1116, %v1147
      %v1188 = vadd.f32 %v1117, %v1147
      %v1189 = vadd.f32 %v1118, %v1147
      %v1190 = vadd.f32 %v1119, %v1147
      %v1191 = vadd.f32 %v1120, %v1147
      %v1192 = vadd.f32 %v1121, %v1147
      %v1193 = vadd.f32 %v1122, %v1147
      %v1194 = vadd.f32 %v1123, %v1147
      %v1195 = vadd.f32 %v1124, %v1147
      %v1196 = vadd.f32 %v1125, %v1147
      %v1197 = vadd.f32 %v1126, %v1147
      %v1198 = vadd.f32 %v1127, %v1147
      %v1199 = vadd.f32 %v1128, %v1147
      %v1200 = vadd.f32 %v1129, %v1147
      %v1201 = vadd.f32 %v1130, %v1147
      %v1202 = vadd.f32 %v1131, %v1147
      %v1203 = vadd.f32 %v1132, %v1147
      %v1204 = vadd.f32 %v1133, %v1147
      %v1205 = vadd.f32 %v1134, %v1147
      %v1206 = vadd.f32 %v1135, %v1147
      %v1207 = vadd.f32 %v1136, %v1147
      %v1208 = vadd.f32 %v1137, %v1147
      %v1209 = vadd.f32 %v1138, %v1147
      %v1210 = vadd.f32 %v1139, %v1147
      %v1211 = vadd.f32 %v1140, %v1147
      %v1212 = vadd.f32 %v1141, %v1147
      %v1213 = vmax.f32 %v1149, 0.0
      %v1214 = vmax.f32 %v1150, 0.0
      %v1215 = vmax.f32 %v1151, 0.0
      %v1216 = vmax.f32 %v1152, 0.0
      %v1217 = vmax.f32 %v1153, 0.0
      %v1218 = vmax.f32 %v1154, 0.0
      %v1219 = vmax.f32 %v1155, 0.0
      %v1220 = vmax.f32 %v1156, 0.0
      %v1221 = vmax.f32 %v1157, 0.0
      %v1222 = vmax.f32 %v1158, 0.0
      %v1223 = vmax.f32 %v1159, 0.0
      %v1224 = vmax.f32 %v1160, 0.0
      %v1225 = vmax.f32 %v1161, 0.0
      %v1226 = vmax.f32 %v1162, 0.0
      %v1227 = vmax.f32 %v1163, 0.0
      %v1228 = vmax.f32 %v1164, 0.0
      %v1229 = vmax.f32 %v1165, 0.0
      %v1230 = vmax.f32 %v1166, 0.0
      %v1231 = vmax.f32 %v1167, 0.0
      %v1232 = vmax.f32 %v1168, 0.0
      %v1233 = vmax.f32 %v1169, 0.0
      %v1234 = vmax.f32 %v1170, 0.0
      %v1235 = vmax.f32 %v1171, 0.0
      %v1236 = vmax.f32 %v1172, 0.0
      %v1237 = vmax.f32 %v1173, 0.0
      %v1238 = vmax.f32 %v1174, 0.0
      %v1239 = vmax.f32 %v1175, 0.0
      %v1240 = vmax.f32 %v1176, 0.0
      %v1241 = vmax.f32 %v1177, 0.0
      %v1242 = vmax.f32 %v1178, 0.0
      %v1243 = vmax.f32 %v1179, 0.0
      %v1244 = vmax.f32 %v1180, 0.0
      %v1245 = vmax.f32 %v1181, 0.0
      %v1246 = vmax.f32 %v1182, 0.0
      %v1247 = vmax.f32 %v1183, 0.0
      %v1248 = vmax.f32 %v1184, 0.0
      %v1249 = vmax.f32 %v1185, 0.0
      %v1250 = vmax.f32 %v1186, 0.0
      %v1251 = vmax.f32 %v1187, 0.0
      %v1252 = vmax.f32 %v1188, 0.0
      %v1253 = vmax.f32 %v1189, 0.0
      %v1254 = vmax.f32 %v1190, 0.0
      %v1255 = vmax.f32 %v1191, 0.0
      %v1256 = vmax.f32 %v1192, 0.0
      %v1257 = vmax.f32 %v1193, 0.0
      %v1258 = vmax.f32 %v1194, 0.0
      %v1259 = vmax.f32 %v1195, 0.0
      %v1260 = vmax.f32 %v1196, 0.0
      %v1261 = vmax.f32 %v1197, 0.0
      %v1262 = vmax.f32 %v1198, 0.0
      %v1263 = vmax.f32 %v1199, 0.0
      %v1264 = vmax.f32 %v1200, 0.0
      %v1265 = vmax.f32 %v1201, 0.0
      %v1266 = vmax.f32 %v1202, 0.0
      %v1267 = vmax.f32 %v1203, 0.0
      %v1268 = vmax.f32 %v1204, 0.0
      %v1269 = vmax.f32 %v1205, 0.0
      %v1270 = vmax.f32 %v1206, 0.0
      %v1271 = vmax.f32 %v1207, 0.0
      %v1272 = vmax.f32 %v1208, 0.0
      %v1273 = vmax.f32 %v1209, 0.0
      %v1274 = vmax.f32 %v1210, 0.0
      %v1275 = vmax.f32 %v1211, 0.0
      %v1276 = vmax.f32 %v1212, 0.0
      %v1277 = vpack.c.bf16 %v1214, %v1213
      %v1278 = vpack.c.bf16 %v1216, %v1215
      %v1279 = vpack.c.bf16 %v1218, %v1217
      %v1280 = vpack.c.bf16 %v1220, %v1219
      %v1281 = vpack.c.bf16 %v1222, %v1221
      %v1282 = vpack.c.bf16 %v1224, %v1223
      %v1283 = vpack.c.bf16 %v1226, %v1225
      %v1284 = vpack.c.bf16 %v1228, %v1227
      %v1285 = vpack.c.bf16 %v1230, %v1229
      %v1286 = vpack.c.bf16 %v1232, %v1231
      %v1287 = vpack.c.bf16 %v1234, %v1233
      %v1288 = vpack.c.bf16 %v1236, %v1235
      %v1289 = vpack.c.bf16 %v1238, %v1237
      %v1290 = vpack.c.bf16 %v1240, %v1239
      %v1291 = vpack.c.bf16 %v1242, %v1241
      %v1292 = vpack.c.bf16 %v1244, %v1243
      %v1293 = vpack.c.bf16 %v1246, %v1245
      %v1294 = vpack.c.bf16 %v1248, %v1247
      %v1295 = vpack.c.bf16 %v1250, %v1249
      %v1296 = vpack.c.bf16 %v1252, %v1251
      %v1297 = vpack.c.bf16 %v1254, %v1253
      %v1298 = vpack.c.bf16 %v1256, %v1255
      %v1299 = vpack.c.bf16 %v1258, %v1257
      %v1300 = vpack.c.bf16 %v1260, %v1259
      %v1301 = vpack.c.bf16 %v1262, %v1261
      %v1302 = vpack.c.bf16 %v1264, %v1263
      %v1303 = vpack.c.bf16 %v1266, %v1265
      %v1304 = vpack.c.bf16 %v1268, %v1267
      %v1305 = vpack.c.bf16 %v1270, %v1269
      %v1306 = vpack.c.bf16 %v1272, %v1271
      %v1307 = vpack.c.bf16 %v1274, %v1273
      %v1308 = vpack.c.bf16 %v1276, %v1275
      %v1341 = vunpack.c.l.b16 %v1277
      %v1342 = vunpack.c.h.b16 %v1277
      %v1343 = vunpack.c.l.b16 %v1278
      %v1344 = vunpack.c.h.b16 %v1278
      %v1345 = vunpack.c.l.b16 %v1279
      %v1346 = vunpack.c.h.b16 %v1279
      %v1347 = vunpack.c.l.b16 %v1280
      %v1348 = vunpack.c.h.b16 %v1280
      %v1349 = vunpack.c.l.b16 %v1281
      %v1350 = vunpack.c.h.b16 %v1281
      %v1351 = vunpack.c.l.b16 %v1282
      %v1352 = vunpack.c.h.b16 %v1282
      %v1353 = vunpack.c.l.b16 %v1283
      %v1354 = vunpack.c.h.b16 %v1283
      %v1355 = vunpack.c.l.b16 %v1284
      %v1356 = vunpack.c.h.b16 %v1284
      %v1357 = vunpack.c.l.b16 %v1285
      %v1358 = vunpack.c.h.b16 %v1285
      %v1359 = vunpack.c.l.b16 %v1286
      %v1360 = vunpack.c.h.b16 %v1286
      %v1361 = vunpack.c.l.b16 %v1287
      %v1362 = vunpack.c.h.b16 %v1287
      %v1363 = vunpack.c.l.b16 %v1288
      %v1364 = vunpack.c.h.b16 %v1288
      %v1365 = vunpack.c.l.b16 %v1289
      %v1366 = vunpack.c.h.b16 %v1289
      %v1367 = vunpack.c.l.b16 %v1290
      %v1368 = vunpack.c.h.b16 %v1290
      %v1369 = vunpack.c.l.b16 %v1291
      %v1370 = vunpack.c.h.b16 %v1291
      %v1371 = vunpack.c.l.b16 %v1292
      %v1372 = vunpack.c.h.b16 %v1292
      %v1373 = vunpack.c.l.b16 %v1293
      %v1374 = vunpack.c.h.b16 %v1293
      %v1375 = vunpack.c.l.b16 %v1294
      %v1376 = vunpack.c.h.b16 %v1294
      %v1377 = vunpack.c.l.b16 %v1295
      %v1378 = vunpack.c.h.b16 %v1295
      %v1379 = vunpack.c.l.b16 %v1296
      %v1380 = vunpack.c.h.b16 %v1296
      %v1381 = vunpack.c.l.b16 %v1297
      %v1382 = vunpack.c.h.b16 %v1297
      %v1383 = vunpack.c.l.b16 %v1298
      %v1384 = vunpack.c.h.b16 %v1298
      %v1385 = vunpack.c.l.b16 %v1299
      %v1386 = vunpack.c.h.b16 %v1299
      %v1387 = vunpack.c.l.b16 %v1300
      %v1388 = vunpack.c.h.b16 %v1300
      %v1389 = vunpack.c.l.b16 %v1301
      %v1390 = vunpack.c.h.b16 %v1301
      %v1391 = vunpack.c.l.b16 %v1302
      %v1392 = vunpack.c.h.b16 %v1302
      %v1393 = vunpack.c.l.b16 %v1303
      %v1394 = vunpack.c.h.b16 %v1303
      %v1395 = vunpack.c.l.b16 %v1304
      %v1396 = vunpack.c.h.b16 %v1304
      %v1397 = vunpack.c.l.b16 %v1305
      %v1398 = vunpack.c.h.b16 %v1305
      %v1399 = vunpack.c.l.b16 %v1306
      %v1400 = vunpack.c.h.b16 %v1306
      %v1401 = vunpack.c.l.b16 %v1307
      %v1402 = vunpack.c.h.b16 %v1307
      %v1403 = vunpack.c.l.b16 %v1308
      %v1404 = vunpack.c.h.b16 %v1308
      %v1405 = vpack.c.b16 %v1341, %v1341
      %v1406 = vpack.c.b16 %v1342, %v1342
      %v1407 = vpack.c.b16 %v1343, %v1343
      %v1408 = vpack.c.b16 %v1344, %v1344
      %v1409 = vpack.c.b16 %v1345, %v1345
      %v1410 = vpack.c.b16 %v1346, %v1346
      %v1411 = vpack.c.b16 %v1347, %v1347
      %v1412 = vpack.c.b16 %v1348, %v1348
      %v1413 = vpack.c.b16 %v1349, %v1349
      %v1414 = vpack.c.b16 %v1350, %v1350
      %v1415 = vpack.c.b16 %v1351, %v1351
      %v1416 = vpack.c.b16 %v1352, %v1352
      %v1417 = vpack.c.b16 %v1353, %v1353
      %v1418 = vpack.c.b16 %v1354, %v1354
      %v1419 = vpack.c.b16 %v1355, %v1355
      %v1420 = vpack.c.b16 %v1356, %v1356
      %v1421 = vpack.c.b16 %v1357, %v1357
      %v1422 = vpack.c.b16 %v1358, %v1358
      %v1423 = vpack.c.b16 %v1359, %v1359
      %v1424 = vpack.c.b16 %v1360, %v1360
      %v1425 = vpack.c.b16 %v1361, %v1361
      %v1426 = vpack.c.b16 %v1362, %v1362
      %v1427 = vpack.c.b16 %v1363, %v1363
      %v1428 = vpack.c.b16 %v1364, %v1364
      %v1429 = vpack.c.b16 %v1365, %v1365
      %v1430 = vpack.c.b16 %v1366, %v1366
      %v1431 = vpack.c.b16 %v1367, %v1367
      %v1432 = vpack.c.b16 %v1368, %v1368
      %v1433 = vpack.c.b16 %v1369, %v1369
      %v1434 = vpack.c.b16 %v1370, %v1370
      %v1435 = vpack.c.b16 %v1371, %v1371
      %v1436 = vpack.c.b16 %v1372, %v1372
      %v1437 = vpack.c.b16 %v1373, %v1373
      %v1438 = vpack.c.b16 %v1374, %v1374
      %v1439 = vpack.c.b16 %v1375, %v1375
      %v1440 = vpack.c.b16 %v1376, %v1376
      %v1441 = vpack.c.b16 %v1377, %v1377
      %v1442 = vpack.c.b16 %v1378, %v1378
      %v1443 = vpack.c.b16 %v1379, %v1379
      %v1444 = vpack.c.b16 %v1380, %v1380
      %v1445 = vpack.c.b16 %v1381, %v1381
      %v1446 = vpack.c.b16 %v1382, %v1382
      %v1447 = vpack.c.b16 %v1383, %v1383
      %v1448 = vpack.c.b16 %v1384, %v1384
      %v1449 = vpack.c.b16 %v1385, %v1385
      %v1450 = vpack.c.b16 %v1386, %v1386
      %v1451 = vpack.c.b16 %v1387, %v1387
      %v1452 = vpack.c.b16 %v1388, %v1388
      %v1453 = vpack.c.b16 %v1389, %v1389
      %v1454 = vpack.c.b16 %v1390, %v1390
      %v1455 = vpack.c.b16 %v1391, %v1391
      %v1456 = vpack.c.b16 %v1392, %v1392
      %v1457 = vpack.c.b16 %v1393, %v1393
      %v1458 = vpack.c.b16 %v1394, %v1394
      %v1459 = vpack.c.b16 %v1395, %v1395
      %v1460 = vpack.c.b16 %v1396, %v1396
      %v1461 = vpack.c.b16 %v1397, %v1397
      %v1462 = vpack.c.b16 %v1398, %v1398
      %v1463 = vpack.c.b16 %v1399, %v1399
      %v1464 = vpack.c.b16 %v1400, %v1400
      %v1465 = vpack.c.b16 %v1401, %v1401
      %v1466 = vpack.c.b16 %v1402, %v1402
      %v1467 = vpack.c.b16 %v1403, %v1403
      %v1468 = vpack.c.b16 %v1404, %v1404
      %vm1533 = vcmask 519168
      %1534 = vst.msk [vmem:[%s267] sm:$0xf] %vm1533, %v1405
      %1535 = vst.msk [vmem:[%s267 + $0x4] sm:$0xf] %vm1533, %v1406
      %1536 = vst.msk [vmem:[%s267 + $0x8] sm:$0xf] %vm1533, %v1407
      %1537 = vst.msk [vmem:[%s267 + $0xc] sm:$0xf] %vm1533, %v1408
      %1538 = vst.msk [vmem:[%s267 + $0x10] sm:$0xf] %vm1533, %v1409
      %1539 = vst.msk [vmem:[%s267 + $0x14] sm:$0xf] %vm1533, %v1410
      %1540 = vst.msk [vmem:[%s267 + $0x18] sm:$0xf] %vm1533, %v1411
      %1541 = vst.msk [vmem:[%s267 + $0x1c] sm:$0xf] %vm1533, %v1412
      %1542 = vst.msk [vmem:[%s267 + $0x20] sm:$0xf] %vm1533, %v1413
      %1543 = vst.msk [vmem:[%s267 + $0x24] sm:$0xf] %vm1533, %v1414
      %1544 = vst.msk [vmem:[%s267 + $0x28] sm:$0xf] %vm1533, %v1415
      %1545 = vst.msk [vmem:[%s267 + $0x2c] sm:$0xf] %vm1533, %v1416
      %1546 = vst.msk [vmem:[%s267 + $0x30] sm:$0xf] %vm1533, %v1417
      %1547 = vst.msk [vmem:[%s267 + $0x34] sm:$0xf] %vm1533, %v1418
      %1548 = vst.msk [vmem:[%s267 + $0x38] sm:$0xf] %vm1533, %v1419
      %1549 = vst.msk [vmem:[%s267 + $0x3c] sm:$0xf] %vm1533, %v1420
      %1550 = vst.msk [vmem:[%s267 + $0x40] sm:$0xf] %vm1533, %v1421
      %1551 = vst.msk [vmem:[%s267 + $0x44] sm:$0xf] %vm1533, %v1422
      %1552 = vst.msk [vmem:[%s267 + $0x48] sm:$0xf] %vm1533, %v1423
      %1553 = vst.msk [vmem:[%s267 + $0x4c] sm:$0xf] %vm1533, %v1424
      %1554 = vst.msk [vmem:[%s267 + $0x50] sm:$0xf] %vm1533, %v1425
      %1555 = vst.msk [vmem:[%s267 + $0x54] sm:$0xf] %vm1533, %v1426
      %1556 = vst.msk [vmem:[%s267 + $0x58] sm:$0xf] %vm1533, %v1427
      %1557 = vst.msk [vmem:[%s267 + $0x5c] sm:$0xf] %vm1533, %v1428
      %1558 = vst.msk [vmem:[%s267 + $0x60] sm:$0xf] %vm1533, %v1429
      %1559 = vst.msk [vmem:[%s267 + $0x64] sm:$0xf] %vm1533, %v1430
      %1560 = vst.msk [vmem:[%s267 + $0x68] sm:$0xf] %vm1533, %v1431
      %1561 = vst.msk [vmem:[%s267 + $0x6c] sm:$0xf] %vm1533, %v1432
      %1562 = vst.msk [vmem:[%s267 + $0x70] sm:$0xf] %vm1533, %v1433
      %1563 = vst.msk [vmem:[%s267 + $0x74] sm:$0xf] %vm1533, %v1434
      %1564 = vst.msk [vmem:[%s267 + $0x78] sm:$0xf] %vm1533, %v1435
      %1565 = vst.msk [vmem:[%s267 + $0x7c] sm:$0xf] %vm1533, %v1436
      %1566 = vst.msk [vmem:[%s267 + $0x80] sm:$0xf] %vm1533, %v1437
      %1567 = vst.msk [vmem:[%s267 + $0x84] sm:$0xf] %vm1533, %v1438
      %1568 = vst.msk [vmem:[%s267 + $0x88] sm:$0xf] %vm1533, %v1439
      %1569 = vst.msk [vmem:[%s267 + $0x8c] sm:$0xf] %vm1533, %v1440
      %1570 = vst.msk [vmem:[%s267 + $0x90] sm:$0xf] %vm1533, %v1441
      %1571 = vst.msk [vmem:[%s267 + $0x94] sm:$0xf] %vm1533, %v1442
      %1572 = vst.msk [vmem:[%s267 + $0x98] sm:$0xf] %vm1533, %v1443
      %1573 = vst.msk [vmem:[%s267 + $0x9c] sm:$0xf] %vm1533, %v1444
      %1574 = vst.msk [vmem:[%s267 + $0xa0] sm:$0xf] %vm1533, %v1445
      %1575 = vst.msk [vmem:[%s267 + $0xa4] sm:$0xf] %vm1533, %v1446
      %1576 = vst.msk [vmem:[%s267 + $0xa8] sm:$0xf] %vm1533, %v1447
      %1577 = vst.msk [vmem:[%s267 + $0xac] sm:$0xf] %vm1533, %v1448
      %1578 = vst.msk [vmem:[%s267 + $0xb0] sm:$0xf] %vm1533, %v1449
      %1579 = vst.msk [vmem:[%s267 + $0xb4] sm:$0xf] %vm1533, %v1450
      %1580 = vst.msk [vmem:[%s267 + $0xb8] sm:$0xf] %vm1533, %v1451
      %1581 = vst.msk [vmem:[%s267 + $0xbc] sm:$0xf] %vm1533, %v1452
      %1582 = vst.msk [vmem:[%s267 + $0xc0] sm:$0xf] %vm1533, %v1453
      %1583 = vst.msk [vmem:[%s267 + $0xc4] sm:$0xf] %vm1533, %v1454
      %1584 = vst.msk [vmem:[%s267 + $0xc8] sm:$0xf] %vm1533, %v1455
      %1585 = vst.msk [vmem:[%s267 + $0xcc] sm:$0xf] %vm1533, %v1456
      %1586 = vst.msk [vmem:[%s267 + $0xd0] sm:$0xf] %vm1533, %v1457
      %1587 = vst.msk [vmem:[%s267 + $0xd4] sm:$0xf] %vm1533, %v1458
      %1588 = vst.msk [vmem:[%s267 + $0xd8] sm:$0xf] %vm1533, %v1459
      %1589 = vst.msk [vmem:[%s267 + $0xdc] sm:$0xf] %vm1533, %v1460
      %1590 = vst.msk [vmem:[%s267 + $0xe0] sm:$0xf] %vm1533, %v1461
      %1591 = vst.msk [vmem:[%s267 + $0xe4] sm:$0xf] %vm1533, %v1462
      %1592 = vst.msk [vmem:[%s267 + $0xe8] sm:$0xf] %vm1533, %v1463
      %1593 = vst.msk [vmem:[%s267 + $0xec] sm:$0xf] %vm1533, %v1464
      %1594 = vst.msk [vmem:[%s267 + $0xf0] sm:$0xf] %vm1533, %v1465
      %1595 = vst.msk [vmem:[%s267 + $0xf4] sm:$0xf] %vm1533, %v1466
      %1596 = vst.msk [vmem:[%s267 + $0xf8] sm:$0xf] %vm1533, %v1467
      %1597 = vst.msk [vmem:[%s267 + $0xfc] sm:$0xf] %vm1533, %v1468
      %s1598 = smul.u32 64, %s19
      %p1599 = scmp.lt.s32.totalorder %s1598, 3135
      %s1600 = scalar_select %p1599, %s1598, 3135
      %p1601 = scmp.lt.s32.totalorder %s20, 0
      %s1602 = scalar_select %p1601, %s20, 0
      %s1603 = sadd.s32 %s1602, %s1600
      %s1604 = smul.addr %s1603, 4
      %s1605 = scalar_lea.vmem %s4, %s1604
      // Predicated region
      $region37: #{conv_bn_act.1} parent=35 // pred_check
        %p1606 = pneg %p151
      $region38: #{conv_bn_act.1} parent=35 // pred_check_branch
        %1608 = sbr.rel (%p1606) target = $region40
      $region39: #{conv_bn_act.1} parent=35 // pred_region
        %s1609 = smul.u32 64, %s19
      $region40: #{conv_bn_act.1} parent=35 // pred_fallthru
        _
    $region36: #{conv_bn_act.1} parent=5 // pred_fallthru
      _
    %p1610 = scmp.le.s32.totalorder 2, %s10
    // Predicated region
    $region41: #{conv_bn_act.1} parent=5 // pred_check
      %p1611 = pneg %p1610
    $region42: #{conv_bn_act.1} parent=5 // pred_check_branch
      %1613 = sbr.rel (%p1611) target = $region44
    $region43: #{conv_bn_act.1} parent=5 // pred_region
      %s1614 = ssub.s32 %s10, 2
      // Predicated region
      $region45: #{conv_bn_act.1} parent=43 // pred_check
        %p1615 = pneg %p157
      $region46: #{conv_bn_act.1} parent=43 // pred_check_branch
        %1617 = sbr.rel (%p1615) target = $region48
      $region47: #{conv_bn_act.1} parent=43 // pred_region
        %s1618 = smul.u32 64, %s21
        %p1619 = scmp.lt.s32.totalorder %s1618, 3135
        %s1620 = scalar_select %p1619, %s1618, 3135
        %p1621 = scmp.lt.s32.totalorder %s22, 0
        %s1622 = scalar_select %p1621, %s22, 0
        %s1623 = sadd.s32 %s1622, %s1620
        %s1624 = smul.addr %s1623, 4
        %s1625 = scalar_lea.vmem %s4, %s1624
      $region48: #{conv_bn_act.1} parent=43 // pred_fallthru
        _
    $region44: #{conv_bn_act.1} parent=5 // pred_fallthru
      _
  $region6: #{conv_bn_act.1} parent=0 // loop_footer
    %s14 = sadd.s32 1, %s10
  $region7: #{conv_bn_act.1} parent=0 // loop_footer_branch
    %9 = sbr.rel target = $region3
  $region8: #{conv_bn_act.1} parent=0 // loop_exit
    _

</llo_original>
